<compile_context>
chip_gen: v7x
topology: tpu7x:2x2x1
jax: 0.10.0
libtpu: 0.0.40
codegen_flags: <defaults>
</compile_context>

<pallas_src>
import functools

import jax
import jax.numpy as jnp
from jax import lax
from jax.experimental import pallas as pl
from jax.experimental.pallas import tpu as pltpu


# ----------------------------- Pallas kernel --------------------------------
def _bottleneck_kernel(x_ref,       # (B, Cin, HW)  f32
                       mask_ref,    # (4, B*HW)     f32 {0,1}
                       bias_ref,    # (6P, 1)       f32   [b1; b2; b3]
                       w1_ref,      # (P, Cin)      bf16
                       w2_ref,      # (P, 9P)       bf16
                       w3_ref,      # (Cout=4P, P)  bf16
                       o_ref,       # (B, Cout, HW) f32
                       cols_ref,    # VMEM scratch (9P, B*HW) bf16
                       *, height, width, batch_block):
    B, H, W = batch_block, height, width
    HW = H * W
    BHW = B * HW
    P = w1_ref.shape[0]

    # ---- conv1 (1x1) + bn1 + relu over the lane-concatenated batch ----
    if B == 1:
        xw = x_ref[0]
    else:
        xw = jnp.concatenate([x_ref[b] for b in range(B)], axis=1)  # (Cin, BHW)
    b1 = bias_ref[pl.ds(0, P), :]
    y1 = jnp.dot(w1_ref[...], xw.astype(jnp.bfloat16),
                 preferred_element_type=jnp.float32)
    y1 = jnp.maximum(y1 + b1, 0.0)                          # (P, BHW) f32

    # ---- conv2 (3x3, stride 1, pad 1) as ONE im2col matmul (K = 9P) ----
    # Horizontal edges: pre-mask the SOURCE columns (col == W-1 for dx=-1,
    # col == 0 for dx=+1) so a pure roll gives zero at invalid destinations.
    # Vertical edges / image boundaries: post-mask the rolled tap on the
    # DESTINATION rows (row == 0 for dy=-1, row == H-1 for dy=+1).
    m_dxm = mask_ref[pl.ds(0, 1), :]     # keep col <= W-2   (for dx = -1)
    m_dxp = mask_ref[pl.ds(1, 1), :]     # keep col >= 1     (for dx = +1)
    m_dym = mask_ref[pl.ds(2, 1), :]     # keep row >= 1     (for dy = -1)
    m_dyp = mask_ref[pl.ds(3, 1), :]     # keep row <= H-2   (for dy = +1)

    src_by_dx = {-1: y1 * m_dxm, 0: y1, 1: y1 * m_dxp}      # f32 pre-masked

    for ky in range(3):
        dy = ky - 1
        for kx in range(3):
            dx = kx - 1
            d = dy * W + dx                                  # flat source shift
            tap = src_by_dx[dx]
            if d != 0:
                # tap[:, s] = src[:, (s + d) mod BHW]  (XLU rotate)
                tap = pltpu.roll(tap, (-d) % BHW, axis=1)
            if dy == -1:
                tap = tap * m_dym
            elif dy == 1:
                tap = tap * m_dyp
            t = ky * 3 + kx
            cols_ref[pl.ds(t * P, P), :] = tap.astype(jnp.bfloat16)

    b2 = bias_ref[pl.ds(P, P), :]
    y2 = jnp.dot(w2_ref[...], cols_ref[...],
                 preferred_element_type=jnp.float32)
    y2 = jnp.maximum(y2 + b2, 0.0)                          # (P, BHW) f32

    # ---- conv3 (1x1) + bn3 ----
    b3 = bias_ref[pl.ds(2 * P, 4 * P), :]
    y3 = jnp.dot(w3_ref[...], y2.astype(jnp.bfloat16),
                 preferred_element_type=jnp.float32) + b3   # (Cout, BHW) f32

    # ---- identity residual (re-read x per image) + relu ----
    for b in range(B):
        o_ref[b] = jnp.maximum(y3[:, b * HW:(b + 1) * HW] + x_ref[b], 0.0)


# --------------------------- BN folding (wrapper) ----------------------------
def _fold_params(params, eps=1e-5):
    """Fold inference BN into conv weights; cast MXU weights to bf16."""
    (w1, g1, be1, m1, v1,
     w2, g2, be2, m2, v2,
     w3, g3, be3, m3, v3) = params

    def scale_bias(g, be, m, v):
        s = g / jnp.sqrt(v + eps)
        return s, be - m * s

    s1, c1 = scale_bias(g1, be1, m1, v1)
    s2, c2 = scale_bias(g2, be2, m2, v2)
    s3, c3 = scale_bias(g3, be3, m3, v3)

    P = w1.shape[0]
    w1f = (w1 * s1[:, None]).astype(jnp.bfloat16)                   # (P, Cin)
    # OIHW -> (O, ky, kx, I) -> (O, 9*I); tap index = ky*3 + kx.
    w2f = ((w2 * s2[:, None, None, None])
           .transpose(0, 2, 3, 1).reshape(P, 9 * w2.shape[1])
           .astype(jnp.bfloat16))                                   # (P, 9P)
    w3f = (w3 * s3[:, None]).astype(jnp.bfloat16)                   # (Cout, P)
    return (w1f, c1[:, None].astype(jnp.float32),
            w2f, c2[:, None].astype(jnp.float32),
            w3f, c3[:, None].astype(jnp.float32))


def _pick_batch_block(n, hw, target_lanes=1024):
    """Images per grid step: widen the matmul lane dim toward target_lanes,
    but keep >= 2 grid steps when n >= 2 so both v7x TensorCores get work."""
    b = max(1, min(n, max(1, target_lanes // max(hw, 1))))
    while b > 1 and n % b != 0:
        b -= 1
    while b > 1 and n // b < 2:
        b -= 1
        while b > 1 and n % b != 0:
            b -= 1
    return b


# ------------------------------- wrapper -------------------------------------
@functools.partial(jax.jit, static_argnames=("eps",))
def bottleneck_pallas(x_nchw, params, eps=1e-5):
    """x_nchw: (N, Cin, H, W) f32.  Returns (N, Cin, H, W) f32 (torch fwd)."""
    w1f, b1, w2f, b2, w3f, b3 = _fold_params(params, eps)
    N, Cin, H, W = x_nchw.shape
    P = w1f.shape[0]
    Cout = w3f.shape[0]
    assert Cout == Cin, "identity residual requires inplanes == planes * 4"
    HW = H * W
    B = _pick_batch_block(N, HW)
    BHW = B * HW

    x3 = x_nchw.reshape(N, Cin, HW)                      # free reshape
    bias_all = jnp.concatenate([b1, b2, b3], axis=0)     # (6P, 1) f32

    # {0,1} edge masks over the lane-concatenated batch (one tiny input).
    pos = jnp.arange(BHW, dtype=jnp.int32)
    col = pos % W
    row = (pos // W) % H
    mask = jnp.stack([col <= W - 2,      # pre-mask source for dx = -1
                      col >= 1,          # pre-mask source for dx = +1
                      row >= 1,          # post-mask dest   for dy = -1
                      row <= H - 2],     # post-mask dest   for dy = +1
                     ).astype(jnp.float32)               # (4, BHW)

    kernel = functools.partial(_bottleneck_kernel,
                               height=H, width=W, batch_block=B)
    full = lambda shp: pl.BlockSpec(shp, lambda n: (0, 0))

    out3 = pl.pallas_call(
        kernel,
        out_shape=jax.ShapeDtypeStruct((N, Cout, HW), jnp.float32),
        grid=(N // B,),
        in_specs=[
            pl.BlockSpec((B, Cin, HW), lambda n: (n, 0, 0)),
            full((4, BHW)),
            full((6 * P, 1)),
            full((P, Cin)),
            full((P, 9 * P)),
            full((Cout, P)),
        ],
        out_specs=pl.BlockSpec((B, Cout, HW), lambda n: (n, 0, 0)),
        scratch_shapes=[pltpu.VMEM((9 * P, BHW), jnp.bfloat16)],
        compiler_params=pltpu.CompilerParams(
            dimension_semantics=("parallel",),
            vmem_limit_bytes=32 * 1024 * 1024),
    )(x3, mask, bias_all, w1f, w2f, w3f)

    return out3.reshape(N, Cout, H, W)


# --------------------------- pure-JAX references ------------------------------
def bottleneck_ref_f32(x, params, eps=1e-5):
    """Full-precision reference (NCHW, OIHW), mirrors the torch module."""
    (w1, g1, be1, m1, v1,
     w2, g2, be2, m2, v2,
     w3, g3, be3, m3, v3) = params

    def bn(y, g, be, m, v):
        s = g / jnp.sqrt(v + eps)
        return y * s[None, :, None, None] + (be - m * s)[None, :, None, None]

    dn = ('NCHW', 'OIHW', 'NCHW')
    y = lax.conv_general_dilated(x, w1[:, :, None, None], (1, 1), 'VALID',
                                 dimension_numbers=dn)
    y = jax.nn.relu(bn(y, g1, be1, m1, v1))
    y = lax.conv_general_dilated(y, w2, (1, 1), ((1, 1), (1, 1)),
                                 dimension_numbers=dn)
    y = jax.nn.relu(bn(y, g2, be2, m2, v2))
    y = lax.conv_general_dilated(y, w3[:, :, None, None], (1, 1), 'VALID',
                                 dimension_numbers=dn)
    y = bn(y, g3, be3, m3, v3)
    return jax.nn.relu(y + x)


def bottleneck_ref_bf16(x, params, eps=1e-5):
    """Same math as the kernel: bf16 MXU inputs, f32 accumulation."""
    w1f, b1, w2f, b2, w3f, b3 = _fold_params(params, eps)
    P = w1f.shape[0]
    dn = ('NCHW', 'OIHW', 'NCHW')
    y = jnp.einsum('pc,nchw->nphw', w1f, x.astype(jnp.bfloat16),
                   preferred_element_type=jnp.float32)
    y = jax.nn.relu(y + b1.reshape(1, P, 1, 1))
    w2b = w2f.reshape(P, 3, 3, P).transpose(0, 3, 1, 2)   # back to OIHW (bf16)
    y = lax.conv_general_dilated(y.astype(jnp.bfloat16), w2b, (1, 1),
                                 ((1, 1), (1, 1)), dimension_numbers=dn,
                                 preferred_element_type=jnp.float32)
    y = jax.nn.relu(y + b2.reshape(1, P, 1, 1))
    y = jnp.einsum('op,nphw->nohw', w3f, y.astype(jnp.bfloat16),
                   preferred_element_type=jnp.float32)
    y = y + b3.reshape(1, -1, 1, 1)
    return jax.nn.relu(y + x)


# ------------------------------ param setup -----------------------------------
def make_params(key, inplanes, planes):
    """Torch-like params: conv weights (OI / OIHW) + per-BN (gamma,beta,mean,var)."""
    exp = 4
    ks = jax.random.split(key, 15)
    n = jax.random.normal

    def bn_params(k0, k1, k2, k3, c):
        gamma = 1.0 + 0.1 * n(k0, (c,), jnp.float32)
        beta = 0.1 * n(k1, (c,), jnp.float32)
        mean = 0.1 * n(k2, (c,), jnp.float32)
        var = jnp.abs(n(k3, (c,), jnp.float32)) + 0.5
        return gamma, beta, mean, var

    w1 = 0.1 * n(ks[0], (planes, inplanes), jnp.float32)            # conv1x1 (O,I)
    g1, be1, m1, v1 = bn_params(ks[1], ks[2], ks[3], ks[4], planes)
    w2 = 0.1 * n(ks[5], (planes, planes, 3, 3), jnp.float32)        # conv3x3 OIHW
    g2, be2, m2, v2 = bn_params(ks[6], ks[7], ks[8], ks[9], planes)
    w3 = 0.1 * n(ks[10], (planes * exp, planes), jnp.float32)       # conv1x1 (O,I)
    g3, be3, m3, v3 = bn_params(ks[11], ks[12], ks[13], ks[14], planes * exp)
    return (w1, g1, be1, m1, v1,
            w2, g2, be2, m2, v2,
            w3, g3, be3, m3, v3)


# --------------------------------- main ---------------------------------------
if __name__ == "__main__":
    # Bottleneck(inplanes=64, planes=16), stride=1, downsample=None.
    # N=4 so batch blocking kicks in (B=2 -> 512-lane matmuls, 2 parallel steps).
    N, inplanes, planes, H, W = 4, 64, 16, 16, 16

    key = jax.random.PRNGKey(0)
    kx, kp = jax.random.split(key)
    x = jax.random.normal(kx, (N, inplanes, H, W), jnp.float32)
    params = make_params(kp, inplanes, planes)

    out = bottleneck_pallas(x, params)
    out = jax.block_until_ready(out)
    assert out.shape == (N, inplanes, H, W)

    ref_bf16 = bottleneck_ref_bf16(x, params)   # same bf16-matmul math -> tight
    ref_f32 = bottleneck_ref_f32(x, params)     # full-precision -> loose
    assert jnp.max(jnp.abs(out - ref_bf16)) < 2e-3, "mismatch vs bf16 reference"
    assert jnp.max(jnp.abs(out - ref_f32)) < 5e-2, "mismatch vs f32 reference"

    print("KERNEL_OK")
</pallas_src>

<mosaic_0001>
module attributes {stable_mosaic.version = 11 : i64} {
  func.func @_bottleneck_kernel(%arg0: i32, %arg1: memref<2x64x256xf32, #tpu.memory_space<vmem>>, %arg2: memref<4x512xf32, #tpu.memory_space<vmem>>, %arg3: memref<96x1xf32, #tpu.memory_space<vmem>>, %arg4: memref<16x64xbf16, #tpu.memory_space<vmem>>, %arg5: memref<16x144xbf16, #tpu.memory_space<vmem>>, %arg6: memref<64x16xbf16, #tpu.memory_space<vmem>>, %arg7: memref<2x64x256xf32, #tpu.memory_space<vmem>>, %arg8: memref<144x512xbf16, #tpu.memory_space<vmem>>) attributes {dimension_semantics = [#tpu.dimension_semantics<parallel>], iteration_bounds = array<i64: 2>, scalar_prefetch = 0 : i64, scratch_operands = 1 : i64, tpu.core_type = #tpu.core_type<tc>, window_params = [{transform_indices = @transform_0, window_bounds = array<i64: 2, 64, 256>}, {pipeline_mode = #tpu.pipeline_mode<synchronous>, transform_indices = @transform_1, window_bounds = array<i64: 4, 512>}, {pipeline_mode = #tpu.pipeline_mode<synchronous>, transform_indices = @transform_2, window_bounds = array<i64: 96, 1>}, {pipeline_mode = #tpu.pipeline_mode<synchronous>, transform_indices = @transform_3, window_bounds = array<i64: 16, 64>}, {pipeline_mode = #tpu.pipeline_mode<synchronous>, transform_indices = @transform_4, window_bounds = array<i64: 16, 144>}, {pipeline_mode = #tpu.pipeline_mode<synchronous>, transform_indices = @transform_5, window_bounds = array<i64: 64, 16>}, {transform_indices = @transform_6, window_bounds = array<i64: 2, 64, 256>}]} {
    %c0 = arith.constant 0 : index
    %c0_0 = arith.constant 0 : index
    %c0_1 = arith.constant 0 : index
    %0 = vector.load %arg1[%c0, %c0_0, %c0_1] : memref<2x64x256xf32, #tpu.memory_space<vmem>>, vector<1x64x256xf32>
    %1 = vector.shape_cast %0 : vector<1x64x256xf32> to vector<64x256xf32>
    %c1 = arith.constant 1 : index
    %c0_2 = arith.constant 0 : index
    %c0_3 = arith.constant 0 : index
    %2 = vector.load %arg1[%c1, %c0_2, %c0_3] : memref<2x64x256xf32, #tpu.memory_space<vmem>>, vector<1x64x256xf32>
    %3 = vector.shape_cast %2 : vector<1x64x256xf32> to vector<64x256xf32>
    %4 = tpu.concatenate %1, %3 in 1 : vector<64x256xf32>, vector<64x256xf32> -> vector<64x512xf32>
    %c0_4 = arith.constant 0 : index
    %c0_5 = arith.constant 0 : index
    %5 = vector.load %arg3[%c0_4, %c0_5] : memref<96x1xf32, #tpu.memory_space<vmem>>, vector<16x1xf32>
    %c0_6 = arith.constant 0 : index
    %c0_7 = arith.constant 0 : index
    %6 = vector.load %arg4[%c0_6, %c0_7] : memref<16x64xbf16, #tpu.memory_space<vmem>>, vector<16x64xbf16>
    %7 = arith.truncf %4 : vector<64x512xf32> to vector<64x512xbf16>
    %cst = arith.constant dense<0.000000e+00> : vector<16x512xf32>
    %8 = tpu.matmul %6, %7, %cst {dimension_numbers = #tpu.dot_dimension_numbers<[1], [0], [0], [1], [0, 0, 1, 1], [], []>} : vector<16x64xbf16>, vector<64x512xbf16>, vector<16x512xf32> -> vector<16x512xf32>
    %9 = vector.broadcast %5 : vector<16x1xf32> to vector<16x512xf32>
    %10 = arith.addf %8, %9 : vector<16x512xf32>
    %cst_8 = arith.constant 0.000000e+00 : f32
    %11 = vector.broadcast %cst_8 : f32 to vector<16x512xf32>
    %12 = arith.maximumf %10, %11 : vector<16x512xf32>
    %c0_9 = arith.constant 0 : index
    %c0_10 = arith.constant 0 : index
    %13 = vector.load %arg2[%c0_9, %c0_10] : memref<4x512xf32, #tpu.memory_space<vmem>>, vector<1x512xf32>
    %c1_11 = arith.constant 1 : index
    %c0_12 = arith.constant 0 : index
    %14 = vector.load %arg2[%c1_11, %c0_12] : memref<4x512xf32, #tpu.memory_space<vmem>>, vector<1x512xf32>
    %c2 = arith.constant 2 : index
    %c0_13 = arith.constant 0 : index
    %15 = vector.load %arg2[%c2, %c0_13] : memref<4x512xf32, #tpu.memory_space<vmem>>, vector<1x512xf32>
    %c3 = arith.constant 3 : index
    %c0_14 = arith.constant 0 : index
    %16 = vector.load %arg2[%c3, %c0_14] : memref<4x512xf32, #tpu.memory_space<vmem>>, vector<1x512xf32>
    %17 = vector.broadcast %13 : vector<1x512xf32> to vector<16x512xf32>
    %18 = arith.mulf %12, %17 : vector<16x512xf32>
    %19 = vector.broadcast %14 : vector<1x512xf32> to vector<16x512xf32>
    %20 = arith.mulf %12, %19 : vector<16x512xf32>
    %c17_i32 = arith.constant 17 : i32
    %21 = tpu.dynamic_rotate %18 by %c17_i32 dim 1 : vector<16x512xf32>, i32 -> vector<16x512xf32>
    %22 = vector.broadcast %15 : vector<1x512xf32> to vector<16x512xf32>
    %23 = arith.mulf %21, %22 : vector<16x512xf32>
    %24 = arith.truncf %23 : vector<16x512xf32> to vector<16x512xbf16>
    %c0_15 = arith.constant 0 : index
    %c0_16 = arith.constant 0 : index
    %25 = vector.load %arg8[%c0_15, %c0_16] : memref<144x512xbf16, #tpu.memory_space<vmem>>, vector<16x512xbf16>
    tpu.vector_store %arg8[%c0_15, %c0_16], %24 {strides = array<i32>} : memref<144x512xbf16, #tpu.memory_space<vmem>>, vector<16x512xbf16>,
    %c16_i32 = arith.constant 16 : i32
    %26 = tpu.dynamic_rotate %12 by %c16_i32 dim 1 : vector<16x512xf32>, i32 -> vector<16x512xf32>
    %27 = vector.broadcast %15 : vector<1x512xf32> to vector<16x512xf32>
    %28 = arith.mulf %26, %27 : vector<16x512xf32>
    %29 = arith.truncf %28 : vector<16x512xf32> to vector<16x512xbf16>
    %c16 = arith.constant 16 : index
    %c0_17 = arith.constant 0 : index
    %30 = vector.load %arg8[%c16, %c0_17] : memref<144x512xbf16, #tpu.memory_space<vmem>>, vector<16x512xbf16>
    tpu.vector_store %arg8[%c16, %c0_17], %29 {strides = array<i32>} : memref<144x512xbf16, #tpu.memory_space<vmem>>, vector<16x512xbf16>,
    %c15_i32 = arith.constant 15 : i32
    %31 = tpu.dynamic_rotate %20 by %c15_i32 dim 1 : vector<16x512xf32>, i32 -> vector<16x512xf32>
    %32 = vector.broadcast %15 : vector<1x512xf32> to vector<16x512xf32>
    %33 = arith.mulf %31, %32 : vector<16x512xf32>
    %34 = arith.truncf %33 : vector<16x512xf32> to vector<16x512xbf16>
    %c32 = arith.constant 32 : index
    %c0_18 = arith.constant 0 : index
    %35 = vector.load %arg8[%c32, %c0_18] : memref<144x512xbf16, #tpu.memory_space<vmem>>, vector<16x512xbf16>
    tpu.vector_store %arg8[%c32, %c0_18], %34 {strides = array<i32>} : memref<144x512xbf16, #tpu.memory_space<vmem>>, vector<16x512xbf16>,
    %c1_i32 = arith.constant 1 : i32
    %36 = tpu.dynamic_rotate %18 by %c1_i32 dim 1 : vector<16x512xf32>, i32 -> vector<16x512xf32>
    %37 = arith.truncf %36 : vector<16x512xf32> to vector<16x512xbf16>
    %c48 = arith.constant 48 : index
    %c0_19 = arith.constant 0 : index
    %38 = vector.load %arg8[%c48, %c0_19] : memref<144x512xbf16, #tpu.memory_space<vmem>>, vector<16x512xbf16>
    tpu.vector_store %arg8[%c48, %c0_19], %37 {strides = array<i32>} : memref<144x512xbf16, #tpu.memory_space<vmem>>, vector<16x512xbf16>,
    %39 = arith.truncf %12 : vector<16x512xf32> to vector<16x512xbf16>
    %c64 = arith.constant 64 : index
    %c0_20 = arith.constant 0 : index
    %40 = vector.load %arg8[%c64, %c0_20] : memref<144x512xbf16, #tpu.memory_space<vmem>>, vector<16x512xbf16>
    tpu.vector_store %arg8[%c64, %c0_20], %39 {strides = array<i32>} : memref<144x512xbf16, #tpu.memory_space<vmem>>, vector<16x512xbf16>,
    %c511_i32 = arith.constant 511 : i32
    %41 = tpu.dynamic_rotate %20 by %c511_i32 dim 1 : vector<16x512xf32>, i32 -> vector<16x512xf32>
    %42 = arith.truncf %41 : vector<16x512xf32> to vector<16x512xbf16>
    %c80 = arith.constant 80 : index
    %c0_21 = arith.constant 0 : index
    %43 = vector.load %arg8[%c80, %c0_21] : memref<144x512xbf16, #tpu.memory_space<vmem>>, vector<16x512xbf16>
    tpu.vector_store %arg8[%c80, %c0_21], %42 {strides = array<i32>} : memref<144x512xbf16, #tpu.memory_space<vmem>>, vector<16x512xbf16>,
    %c497_i32 = arith.constant 497 : i32
    %44 = tpu.dynamic_rotate %18 by %c497_i32 dim 1 : vector<16x512xf32>, i32 -> vector<16x512xf32>
    %45 = vector.broadcast %16 : vector<1x512xf32> to vector<16x512xf32>
    %46 = arith.mulf %44, %45 : vector<16x512xf32>
    %47 = arith.truncf %46 : vector<16x512xf32> to vector<16x512xbf16>
    %c96 = arith.constant 96 : index
    %c0_22 = arith.constant 0 : index
    %48 = vector.load %arg8[%c96, %c0_22] : memref<144x512xbf16, #tpu.memory_space<vmem>>, vector<16x512xbf16>
    tpu.vector_store %arg8[%c96, %c0_22], %47 {strides = array<i32>} : memref<144x512xbf16, #tpu.memory_space<vmem>>, vector<16x512xbf16>,
    %c496_i32 = arith.constant 496 : i32
    %49 = tpu.dynamic_rotate %12 by %c496_i32 dim 1 : vector<16x512xf32>, i32 -> vector<16x512xf32>
    %50 = vector.broadcast %16 : vector<1x512xf32> to vector<16x512xf32>
    %51 = arith.mulf %49, %50 : vector<16x512xf32>
    %52 = arith.truncf %51 : vector<16x512xf32> to vector<16x512xbf16>
    %c112 = arith.constant 112 : index
    %c0_23 = arith.constant 0 : index
    %53 = vector.load %arg8[%c112, %c0_23] : memref<144x512xbf16, #tpu.memory_space<vmem>>, vector<16x512xbf16>
    tpu.vector_store %arg8[%c112, %c0_23], %52 {strides = array<i32>} : memref<144x512xbf16, #tpu.memory_space<vmem>>, vector<16x512xbf16>,
    %c495_i32 = arith.constant 495 : i32
    %54 = tpu.dynamic_rotate %20 by %c495_i32 dim 1 : vector<16x512xf32>, i32 -> vector<16x512xf32>
    %55 = vector.broadcast %16 : vector<1x512xf32> to vector<16x512xf32>
    %56 = arith.mulf %54, %55 : vector<16x512xf32>
    %57 = arith.truncf %56 : vector<16x512xf32> to vector<16x512xbf16>
    %c128 = arith.constant 128 : index
    %c0_24 = arith.constant 0 : index
    %58 = vector.load %arg8[%c128, %c0_24] : memref<144x512xbf16, #tpu.memory_space<vmem>>, vector<16x512xbf16>
    tpu.vector_store %arg8[%c128, %c0_24], %57 {strides = array<i32>} : memref<144x512xbf16, #tpu.memory_space<vmem>>, vector<16x512xbf16>,
    %c16_25 = arith.constant 16 : index
    %c0_26 = arith.constant 0 : index
    %59 = vector.load %arg3[%c16_25, %c0_26] : memref<96x1xf32, #tpu.memory_space<vmem>>, vector<16x1xf32>
    %c0_27 = arith.constant 0 : index
    %c0_28 = arith.constant 0 : index
    %60 = vector.load %arg5[%c0_27, %c0_28] : memref<16x144xbf16, #tpu.memory_space<vmem>>, vector<16x144xbf16>
    %c0_29 = arith.constant 0 : index
    %c0_30 = arith.constant 0 : index
    %61 = vector.load %arg8[%c0_29, %c0_30] : memref<144x512xbf16, #tpu.memory_space<vmem>>, vector<144x512xbf16>
    %cst_31 = arith.constant dense<0.000000e+00> : vector<16x512xf32>
    %62 = tpu.matmul %60, %61, %cst_31 {dimension_numbers = #tpu.dot_dimension_numbers<[1], [0], [0], [1], [0, 0, 1, 1], [], []>} : vector<16x144xbf16>, vector<144x512xbf16>, vector<16x512xf32> -> vector<16x512xf32>
    %63 = vector.broadcast %59 : vector<16x1xf32> to vector<16x512xf32>
    %64 = arith.addf %62, %63 : vector<16x512xf32>
    %cst_32 = arith.constant 0.000000e+00 : f32
    %65 = vector.broadcast %cst_32 : f32 to vector<16x512xf32>
    %66 = arith.maximumf %64, %65 : vector<16x512xf32>
    %c32_33 = arith.constant 32 : index
    %c0_34 = arith.constant 0 : index
    %67 = vector.load %arg3[%c32_33, %c0_34] : memref<96x1xf32, #tpu.memory_space<vmem>>, vector<64x1xf32>
    %c0_35 = arith.constant 0 : index
    %c0_36 = arith.constant 0 : index
    %68 = vector.load %arg6[%c0_35, %c0_36] : memref<64x16xbf16, #tpu.memory_space<vmem>>, vector<64x16xbf16>
    %69 = arith.truncf %66 : vector<16x512xf32> to vector<16x512xbf16>
    %cst_37 = arith.constant dense<0.000000e+00> : vector<64x512xf32>
    %70 = tpu.matmul %68, %69, %cst_37 {dimension_numbers = #tpu.dot_dimension_numbers<[1], [0], [0], [1], [0, 0, 1, 1], [], []>} : vector<64x16xbf16>, vector<16x512xbf16>, vector<64x512xf32> -> vector<64x512xf32>
    %71 = vector.broadcast %67 : vector<64x1xf32> to vector<64x512xf32>
    %72 = arith.addf %70, %71 : vector<64x512xf32>
    %73 = vector.extract_strided_slice %72 {offsets = [0, 0], sizes = [64, 256], strides = [1, 1]} : vector<64x512xf32> to vector<64x256xf32>
    %c0_38 = arith.constant 0 : index
    %c0_39 = arith.constant 0 : index
    %c0_40 = arith.constant 0 : index
    %74 = vector.load %arg1[%c0_38, %c0_39, %c0_40] : memref<2x64x256xf32, #tpu.memory_space<vmem>>, vector<1x64x256xf32>
    %75 = vector.shape_cast %74 : vector<1x64x256xf32> to vector<64x256xf32>
    %76 = arith.addf %73, %75 : vector<64x256xf32>
    %cst_41 = arith.constant 0.000000e+00 : f32
    %77 = vector.broadcast %cst_41 : f32 to vector<64x256xf32>
    %78 = arith.maximumf %76, %77 : vector<64x256xf32>
    %c0_42 = arith.constant 0 : index
    %c0_43 = arith.constant 0 : index
    %c0_44 = arith.constant 0 : index
    %79 = vector.load %arg7[%c0_42, %c0_43, %c0_44] : memref<2x64x256xf32, #tpu.memory_space<vmem>>, vector<1x64x256xf32>
    %80 = vector.shape_cast %79 : vector<1x64x256xf32> to vector<64x256xf32>
    %81 = vector.shape_cast %78 : vector<64x256xf32> to vector<1x64x256xf32>
    tpu.vector_store %arg7[%c0_42, %c0_43, %c0_44], %81 {strides = array<i32>} : memref<2x64x256xf32, #tpu.memory_space<vmem>>, vector<1x64x256xf32>,
    %82 = vector.extract_strided_slice %72 {offsets = [0, 256], sizes = [64, 256], strides = [1, 1]} : vector<64x512xf32> to vector<64x256xf32>
    %c1_45 = arith.constant 1 : index
    %c0_46 = arith.constant 0 : index
    %c0_47 = arith.constant 0 : index
    %83 = vector.load %arg1[%c1_45, %c0_46, %c0_47] : memref<2x64x256xf32, #tpu.memory_space<vmem>>, vector<1x64x256xf32>
    %84 = vector.shape_cast %83 : vector<1x64x256xf32> to vector<64x256xf32>
    %85 = arith.addf %82, %84 : vector<64x256xf32>
    %cst_48 = arith.constant 0.000000e+00 : f32
    %86 = vector.broadcast %cst_48 : f32 to vector<64x256xf32>
    %87 = arith.maximumf %85, %86 : vector<64x256xf32>
    %c1_49 = arith.constant 1 : index
    %c0_50 = arith.constant 0 : index
    %c0_51 = arith.constant 0 : index
    %88 = vector.load %arg7[%c1_49, %c0_50, %c0_51] : memref<2x64x256xf32, #tpu.memory_space<vmem>>, vector<1x64x256xf32>
    %89 = vector.shape_cast %88 : vector<1x64x256xf32> to vector<64x256xf32>
    %90 = vector.shape_cast %87 : vector<64x256xf32> to vector<1x64x256xf32>
    tpu.vector_store %arg7[%c1_49, %c0_50, %c0_51], %90 {strides = array<i32>} : memref<2x64x256xf32, #tpu.memory_space<vmem>>, vector<1x64x256xf32>,
    return
  }
  func.func @transform_0(%arg0: i32) -> (i32, i32, i32) {
    %c0_i32 = arith.constant 0 : i32
    %c0_i32_0 = arith.constant 0 : i32
    %c0_i32_1 = arith.constant 0 : i32
    return %arg0, %c0_i32, %c0_i32_0 : i32, i32, i32
  }
  func.func @transform_1(%arg0: i32) -> (i32, i32) {
    %c0_i32 = arith.constant 0 : i32
    %c0_i32_0 = arith.constant 0 : i32
    %c0_i32_1 = arith.constant 0 : i32
    return %c0_i32, %c0_i32_0 : i32, i32
  }
  func.func @transform_2(%arg0: i32) -> (i32, i32) {
    %c0_i32 = arith.constant 0 : i32
    %c0_i32_0 = arith.constant 0 : i32
    %c0_i32_1 = arith.constant 0 : i32
    return %c0_i32, %c0_i32_0 : i32, i32
  }
  func.func @transform_3(%arg0: i32) -> (i32, i32) {
    %c0_i32 = arith.constant 0 : i32
    %c0_i32_0 = arith.constant 0 : i32
    %c0_i32_1 = arith.constant 0 : i32
    return %c0_i32, %c0_i32_0 : i32, i32
  }
  func.func @transform_4(%arg0: i32) -> (i32, i32) {
    %c0_i32 = arith.constant 0 : i32
    %c0_i32_0 = arith.constant 0 : i32
    %c0_i32_1 = arith.constant 0 : i32
    return %c0_i32, %c0_i32_0 : i32, i32
  }
  func.func @transform_5(%arg0: i32) -> (i32, i32) {
    %c0_i32 = arith.constant 0 : i32
    %c0_i32_0 = arith.constant 0 : i32
    %c0_i32_1 = arith.constant 0 : i32
    return %c0_i32, %c0_i32_0 : i32, i32
  }
  func.func @transform_6(%arg0: i32) -> (i32, i32, i32) {
    %c0_i32 = arith.constant 0 : i32
    %c0_i32_0 = arith.constant 0 : i32
    %c0_i32_1 = arith.constant 0 : i32
    return %arg0, %c0_i32, %c0_i32_0 : i32, i32, i32
  }
}

</mosaic_0001>

<llo_original>
// kernel: bottleneck_pallas.1
$region0: #{bottleneck_pallas.1}
  #allocation0 [shape = 'u32[]', space=smem, size = 0x4, offset = 0x4, fixed_abs, tag = 'smem constant byte address 0x4 - core index']
  #allocation1 [shape = 'u32[144,128]{1,0:T(1,128)}', space=vmem, size = 0x12000, scoped, tag = 'internal scratch']
  #allocation2 [shape = 'bf16[144,512]{1,0:T(16,128)(2,1)}', space=vmem, size = 0x24000, scoped, tag = 'scratch operand']
  %s0 = inlined_call_operand.vmem [shape: f32[4,64,256], index: 0, kind: input, shape index: {}]
  %s1 = inlined_call_operand.vmem [shape: f32[4,512], index: 1, kind: input, shape index: {}]
  %s2 = inlined_call_operand.vmem [shape: f32[96,1], index: 2, kind: input, shape index: {}]
  %s3 = inlined_call_operand.vmem [shape: bf16[16,64], index: 3, kind: input, shape index: {}]
  %s4 = inlined_call_operand.vmem [shape: bf16[16,144], index: 4, kind: input, shape index: {}]
  %s5 = inlined_call_operand.vmem [shape: bf16[64,16], index: 5, kind: input, shape index: {}]
  %s6 = inlined_call_operand.vmem [shape: f32[4,64,256], index: 6, kind: output, shape index: {}]
  %s7 = sld [smem:[#allocation0]]
  $region57: #{bottleneck_pallas.1} parent=0
    _
  %s9 = ssub.s32 1, %s7
  %s10 = scalar_select 0, %s9, %s7
  loop: start=0, step=1, limit=4
  $region2: #{bottleneck_pallas.1} parent=0 // loop_pre_header
    _
  $region3: #{bottleneck_pallas.1} parent=0 // loop_header
    %s12 = sphi 0, %s16
    %p13 = scmp.ge.s32.totalorder %s12, 4
    %s22 = sphi 0, %s24
    %s25 = sphi 0, %s22
    %s26 = sphi 0, %s25
    %s42 = sphi 0, %s26
    %s46 = sphi 0, %s46
    %s48 = sphi 0, %s46
    %s49 = sphi 0, %s48
    %s63 = sphi 0, %s49
    %s67 = sphi 0, %s67
    %s69 = sphi 0, %s67
    %s70 = sphi 0, %s69
    %s84 = sphi 0, %s70
    %s88 = sphi 0, %s88
    %s90 = sphi 0, %s88
    %s91 = sphi 0, %s90
    %s105 = sphi 0, %s91
    %s109 = sphi 0, %s109
    %s111 = sphi 0, %s109
    %s112 = sphi 0, %s111
    %s126 = sphi 0, %s112
    %s130 = sphi 0, %s130
    %s132 = sphi 0, %s130
    %s133 = sphi 0, %s132
    %s147 = sphi 0, %s133
    %s153 = sphi 0, %s155
    %s156 = sphi 0, %s153
    %s157 = sphi 0, %s156
    %s173 = sphi 0, %s157
  $region4: #{bottleneck_pallas.1} parent=0 // loop_header_branch
    %15 = sbr.rel (%p13) target = $region8
  $region5: #{bottleneck_pallas.1} parent=0 // loop_body
    %s17 = ssub.s32 %s12, 1
    %s18 = ssub.s32 %s12, 2
    %s19 = sadd.s32 %s12, 1
    %s20 = ssub.s32 %s12, %s19
    %p21 = scmp.eq.s32.totalorder %s20, 0
    %s23 = sadd.s32 %s22, 1
    %s24 = scalar_select %p21, %s22, %s23
    %p27 = pneg %p21
    %p28 = scmp.eq.s32.totalorder %s12, 1
    %p29 = por %p27, %p28
    %p30 = scmp.ne.s32.totalorder %s22, %s25
    %p31 = scmp.eq.s32.totalorder %s12, 0
    %p32 = por %p30, %p31
    %p33 = scmp.ne.s32.totalorder %s22, %s25
    %p34 = scmp.eq.s32.totalorder %s17, 1
    %p35 = por %p33, %p34
    %p36 = scmp.ne.s32.totalorder %s25, %s26
    %p37 = scmp.eq.s32.totalorder %s17, 0
    %p38 = por %p36, %p37
    %p39 = scmp.ne.s32.totalorder %s25, %s26
    %p40 = scmp.eq.s32.totalorder %s18, 1
    %p41 = por %p39, %p40
    %p43 = scmp.ne.s32.totalorder %s26, %s42
    %p44 = scmp.eq.s32.totalorder %s18, 0
    %p45 = por %p43, %p44
    %s47 = sadd.s32 %s46, 1
    %p50 = scmp.eq.s32.totalorder %s12, 1
    %p51 = scmp.ne.s32.totalorder %s46, %s48
    %p52 = scmp.eq.s32.totalorder %s12, 0
    %p53 = por %p51, %p52
    %p54 = scmp.ne.s32.totalorder %s46, %s48
    %p55 = scmp.eq.s32.totalorder %s17, 1
    %p56 = por %p54, %p55
    %p57 = scmp.ne.s32.totalorder %s48, %s49
    %p58 = scmp.eq.s32.totalorder %s17, 0
    %p59 = por %p57, %p58
    %p60 = scmp.ne.s32.totalorder %s48, %s49
    %p61 = scmp.eq.s32.totalorder %s18, 1
    %p62 = por %p60, %p61
    %p64 = scmp.ne.s32.totalorder %s49, %s63
    %p65 = scmp.eq.s32.totalorder %s18, 0
    %p66 = por %p64, %p65
    %s68 = sadd.s32 %s67, 1
    %p71 = scmp.eq.s32.totalorder %s12, 1
    %p72 = scmp.ne.s32.totalorder %s67, %s69
    %p73 = scmp.eq.s32.totalorder %s12, 0
    %p74 = por %p72, %p73
    %p75 = scmp.ne.s32.totalorder %s67, %s69
    %p76 = scmp.eq.s32.totalorder %s17, 1
    %p77 = por %p75, %p76
    %p78 = scmp.ne.s32.totalorder %s69, %s70
    %p79 = scmp.eq.s32.totalorder %s17, 0
    %p80 = por %p78, %p79
    %p81 = scmp.ne.s32.totalorder %s69, %s70
    %p82 = scmp.eq.s32.totalorder %s18, 1
    %p83 = por %p81, %p82
    %p85 = scmp.ne.s32.totalorder %s70, %s84
    %p86 = scmp.eq.s32.totalorder %s18, 0
    %p87 = por %p85, %p86
    %s89 = sadd.s32 %s88, 1
    %p92 = scmp.eq.s32.totalorder %s12, 1
    %p93 = scmp.ne.s32.totalorder %s88, %s90
    %p94 = scmp.eq.s32.totalorder %s12, 0
    %p95 = por %p93, %p94
    %p96 = scmp.ne.s32.totalorder %s88, %s90
    %p97 = scmp.eq.s32.totalorder %s17, 1
    %p98 = por %p96, %p97
    %p99 = scmp.ne.s32.totalorder %s90, %s91
    %p100 = scmp.eq.s32.totalorder %s17, 0
    %p101 = por %p99, %p100
    %p102 = scmp.ne.s32.totalorder %s90, %s91
    %p103 = scmp.eq.s32.totalorder %s18, 1
    %p104 = por %p102, %p103
    %p106 = scmp.ne.s32.totalorder %s91, %s105
    %p107 = scmp.eq.s32.totalorder %s18, 0
    %p108 = por %p106, %p107
    %s110 = sadd.s32 %s109, 1
    %p113 = scmp.eq.s32.totalorder %s12, 1
    %p114 = scmp.ne.s32.totalorder %s109, %s111
    %p115 = scmp.eq.s32.totalorder %s12, 0
    %p116 = por %p114, %p115
    %p117 = scmp.ne.s32.totalorder %s109, %s111
    %p118 = scmp.eq.s32.totalorder %s17, 1
    %p119 = por %p117, %p118
    %p120 = scmp.ne.s32.totalorder %s111, %s112
    %p121 = scmp.eq.s32.totalorder %s17, 0
    %p122 = por %p120, %p121
    %p123 = scmp.ne.s32.totalorder %s111, %s112
    %p124 = scmp.eq.s32.totalorder %s18, 1
    %p125 = por %p123, %p124
    %p127 = scmp.ne.s32.totalorder %s112, %s126
    %p128 = scmp.eq.s32.totalorder %s18, 0
    %p129 = por %p127, %p128
    %s131 = sadd.s32 %s130, 1
    %p134 = scmp.eq.s32.totalorder %s12, 1
    %p135 = scmp.ne.s32.totalorder %s130, %s132
    %p136 = scmp.eq.s32.totalorder %s12, 0
    %p137 = por %p135, %p136
    %p138 = scmp.ne.s32.totalorder %s130, %s132
    %p139 = scmp.eq.s32.totalorder %s17, 1
    %p140 = por %p138, %p139
    %p141 = scmp.ne.s32.totalorder %s132, %s133
    %p142 = scmp.eq.s32.totalorder %s17, 0
    %p143 = por %p141, %p142
    %p144 = scmp.ne.s32.totalorder %s132, %s133
    %p145 = scmp.eq.s32.totalorder %s18, 1
    %p146 = por %p144, %p145
    %p148 = scmp.ne.s32.totalorder %s133, %s147
    %p149 = scmp.eq.s32.totalorder %s18, 0
    %p150 = por %p148, %p149
    %s151 = ssub.s32 %s12, %s19
    %p152 = scmp.eq.s32.totalorder %s151, 0
    %s154 = sadd.s32 %s153, 1
    %s155 = scalar_select %p152, %s153, %s154
    %p158 = pneg %p152
    %p159 = scmp.eq.s32.totalorder %s12, 1
    %p160 = por %p158, %p159
    %p161 = scmp.ne.s32.totalorder %s153, %s156
    %p162 = scmp.eq.s32.totalorder %s12, 0
    %p163 = por %p161, %p162
    %p164 = scmp.ne.s32.totalorder %s153, %s156
    %p165 = scmp.eq.s32.totalorder %s17, 1
    %p166 = por %p164, %p165
    %p167 = scmp.ne.s32.totalorder %s156, %s157
    %p168 = scmp.eq.s32.totalorder %s17, 0
    %p169 = por %p167, %p168
    %p170 = scmp.ne.s32.totalorder %s156, %s157
    %p171 = scmp.eq.s32.totalorder %s18, 1
    %p172 = por %p170, %p171
    %p174 = scmp.ne.s32.totalorder %s157, %s173
    %p175 = scmp.eq.s32.totalorder %s18, 0
    %p176 = por %p174, %p175
    %p177 = scmp.le.s32.totalorder 1, %s12
    %p178 = scmp.lt.s32.totalorder %s12, 3
    %p179 = pnand %p177, %p178
    %p180 = pneg %p179
    // Predicated region
    $region9: #{bottleneck_pallas.1} parent=5 // pred_check
      _
    $region10: #{bottleneck_pallas.1} parent=5 // pred_check_branch
      %182 = sbr.rel (%p179) target = $region12
    $region11: #{bottleneck_pallas.1} parent=5 // pred_region
      %s183 = ssub.s32 %s12, 1
      // Predicated region
      $region13: #{bottleneck_pallas.1} parent=11 // pred_check
        %p184 = pneg %p59
      $region14: #{bottleneck_pallas.1} parent=11 // pred_check_branch
        %186 = sbr.rel (%p184) target = $region16
      $region15: #{bottleneck_pallas.1} parent=11 // pred_region
        _
      $region16: #{bottleneck_pallas.1} parent=11 // pred_fallthru
        _
      // Predicated region
      $region17: #{bottleneck_pallas.1} parent=11 // pred_check
        %p187 = pneg %p80
      $region18: #{bottleneck_pallas.1} parent=11 // pred_check_branch
        %189 = sbr.rel (%p187) target = $region20
      $region19: #{bottleneck_pallas.1} parent=11 // pred_region
        _
      $region20: #{bottleneck_pallas.1} parent=11 // pred_fallthru
        _
      // Predicated region
      $region21: #{bottleneck_pallas.1} parent=11 // pred_check
        %p190 = pneg %p101
      $region22: #{bottleneck_pallas.1} parent=11 // pred_check_branch
        %192 = sbr.rel (%p190) target = $region24
      $region23: #{bottleneck_pallas.1} parent=11 // pred_region
        _
      $region24: #{bottleneck_pallas.1} parent=11 // pred_fallthru
        _
      // Predicated region
      $region25: #{bottleneck_pallas.1} parent=11 // pred_check
        %p193 = pneg %p122
      $region26: #{bottleneck_pallas.1} parent=11 // pred_check_branch
        %195 = sbr.rel (%p193) target = $region28
      $region27: #{bottleneck_pallas.1} parent=11 // pred_region
        _
      $region28: #{bottleneck_pallas.1} parent=11 // pred_fallthru
        _
      // Predicated region
      $region29: #{bottleneck_pallas.1} parent=11 // pred_check
        %p196 = pneg %p143
      $region30: #{bottleneck_pallas.1} parent=11 // pred_check_branch
        %198 = sbr.rel (%p196) target = $region32
      $region31: #{bottleneck_pallas.1} parent=11 // pred_region
        _
      $region32: #{bottleneck_pallas.1} parent=11 // pred_fallthru
        _
    $region12: #{bottleneck_pallas.1} parent=5 // pred_fallthru
      _
    %p199 = scmp.lt.s32.totalorder %s12, 2
    // Predicated region
    $region33: #{bottleneck_pallas.1} parent=5 // pred_check
      %p200 = pneg %p199
    $region34: #{bottleneck_pallas.1} parent=5 // pred_check_branch
      %202 = sbr.rel (%p200) target = $region36
    $region35: #{bottleneck_pallas.1} parent=5 // pred_region
      // Predicated region
      $region37: #{bottleneck_pallas.1} parent=35 // pred_check
        %p203 = pneg %p32
      $region38: #{bottleneck_pallas.1} parent=35 // pred_check_branch
        %205 = sbr.rel (%p203) target = $region40
      $region39: #{bottleneck_pallas.1} parent=35 // pred_region
        %s206 = smul.u32 2, %s12
        %p207 = scmp.lt.s32.totalorder %s206, 3
        %s208 = scalar_select %p207, %s206, 3
        %s209 = smul.addr %s208, 16
        %s210 = smul.addr %s209, 8
        %s211 = scalar_lea.vmem %s0, %s210
        %s212 = smul.u32 2, %s12
      $region40: #{bottleneck_pallas.1} parent=35 // pred_fallthru
        _
    $region36: #{bottleneck_pallas.1} parent=5 // pred_fallthru
      _
    %p213 = scmp.le.s32.totalorder 1, %s12
    %p214 = scmp.lt.s32.totalorder %s12, 3
    %p215 = pnand %p213, %p214
    %p216 = pneg %p215
    // Predicated region
    $region41: #{bottleneck_pallas.1} parent=5 // pred_check
      _
    $region42: #{bottleneck_pallas.1} parent=5 // pred_check_branch
      %218 = sbr.rel (%p215) target = $region44
    $region43: #{bottleneck_pallas.1} parent=5 // pred_region
      %s219 = ssub.s32 %s12, 1
      %s220 = smul.u32 2, %s17
      %p221 = scmp.lt.s32.totalorder %s220, 3
      %s222 = scalar_select %p221, %s220, 3
      %s223 = smul.addr %s222, 16
      %s224 = smul.addr %s223, 8
      %s225 = scalar_lea.vmem %s0, %s224
      %p226 = pneg %p38
      %p227 = pneg %p35
      %p228 = pneg %p59
      %p229 = pneg %p56
      %p230 = pneg %p80
      %p231 = pneg %p77
      %p232 = pneg %p101
      %p233 = pneg %p98
      %p234 = pneg %p122
      %p235 = pneg %p119
      %p236 = pneg %p143
      %p237 = pneg %p140
      %p238 = pneg %p169
      %p239 = pneg %p166
      %s240 = smul.u32 2, %s17
      %p241 = scmp.lt.s32.totalorder %s240, 3
      %s242 = scalar_select %p241, %s240, 3
      %s243 = smul.addr %s242, 16
      %s244 = smul.addr %s243, 8
      %s245 = scalar_lea.vmem %s6, %s244
      %s246 = smul.u32 2, %s17
      %p247 = scmp.lt.s32.totalorder %s246, 3
      %s248 = scalar_select %p247, %s246, 3
      %s249 = smul.addr %s248, 16
      %s250 = smul.addr %s249, 8
      %s251 = scalar_lea.vmem %s0, %s250
      %s252 = smul.u32 2, %s17
      %s253 = smul.u32 2, %s17
      %p254 = scmp.lt.s32.totalorder %s253, 3
      %s255 = scalar_select %p254, %s253, 3
      %s256 = smul.addr %s255, 16
      %s257 = smul.addr %s256, 8
      %s258 = scalar_lea.vmem %s6, %s257
      %s259 = smul.u32 2, %s17
      %v261 = vld [vmem:[%s251] sm:$0xff]
      %v262 = vld [vmem:[%s251 + $0x8] sm:$0xff]
      %v263 = vld [vmem:[%s251 + $0x10] sm:$0xff]
      %v264 = vld [vmem:[%s251 + $0x18] sm:$0xff]
      %v265 = vld [vmem:[%s251 + $0x20] sm:$0xff]
      %v266 = vld [vmem:[%s251 + $0x28] sm:$0xff]
      %v267 = vld [vmem:[%s251 + $0x30] sm:$0xff]
      %v268 = vld [vmem:[%s251 + $0x38] sm:$0xff]
      %v269 = vld [vmem:[%s251 + $0x40] sm:$0xff]
      %v270 = vld [vmem:[%s251 + $0x48] sm:$0xff]
      %v271 = vld [vmem:[%s251 + $0x50] sm:$0xff]
      %v272 = vld [vmem:[%s251 + $0x58] sm:$0xff]
      %v273 = vld [vmem:[%s251 + $0x60] sm:$0xff]
      %v274 = vld [vmem:[%s251 + $0x68] sm:$0xff]
      %v275 = vld [vmem:[%s251 + $0x70] sm:$0xff]
      %v276 = vld [vmem:[%s251 + $0x78] sm:$0xff]
      %s277 = scalar_lea.vmem %s251, 128
      %v278 = vld [vmem:[%s277] sm:$0xff]
      %v279 = vld [vmem:[%s277 + $0x8] sm:$0xff]
      %v280 = vld [vmem:[%s277 + $0x10] sm:$0xff]
      %v281 = vld [vmem:[%s277 + $0x18] sm:$0xff]
      %v282 = vld [vmem:[%s277 + $0x20] sm:$0xff]
      %v283 = vld [vmem:[%s277 + $0x28] sm:$0xff]
      %v284 = vld [vmem:[%s277 + $0x30] sm:$0xff]
      %v285 = vld [vmem:[%s277 + $0x38] sm:$0xff]
      %v286 = vld [vmem:[%s277 + $0x40] sm:$0xff]
      %v287 = vld [vmem:[%s277 + $0x48] sm:$0xff]
      %v288 = vld [vmem:[%s277 + $0x50] sm:$0xff]
      %v289 = vld [vmem:[%s277 + $0x58] sm:$0xff]
      %v290 = vld [vmem:[%s277 + $0x60] sm:$0xff]
      %v291 = vld [vmem:[%s277 + $0x68] sm:$0xff]
      %v292 = vld [vmem:[%s277 + $0x70] sm:$0xff]
      %v293 = vld [vmem:[%s277 + $0x78] sm:$0xff]
      %v294 = vld [vmem:[%s2] sm:$0xff]
      %v295 = vld [vmem:[%s2 + $0x8] sm:$0xff]
      %v296 = vld [vmem:[%s3] sm:$0xf]
      %v297 = vld [vmem:[%s3 + $0x4] sm:$0xf]
      %v298 = vpack.c.bf16 %v263, %v261
      %v299 = vpack.c.bf16 %v264, %v262
      %v300 = vpack.c.bf16 %v280, %v278
      %v301 = vpack.c.bf16 %v281, %v279
      %v302 = vpack.c.bf16 %v267, %v265
      %v303 = vpack.c.bf16 %v268, %v266
      %v304 = vpack.c.bf16 %v284, %v282
      %v305 = vpack.c.bf16 %v285, %v283
      %v306 = vpack.c.bf16 %v271, %v269
      %v307 = vpack.c.bf16 %v272, %v270
      %v308 = vpack.c.bf16 %v288, %v286
      %v309 = vpack.c.bf16 %v289, %v287
      %v310 = vpack.c.bf16 %v275, %v273
      %v311 = vpack.c.bf16 %v276, %v274
      %v312 = vpack.c.bf16 %v292, %v290
      %v313 = vpack.c.bf16 %v293, %v291
      %315 = vset.pattern.permute.xlu0 0
      %316 = vperm.xlu0 %315, %v294
      %v317 = vpop.permute.xlu0 %316
      %320 = vset.pattern.permute.xlu0 0
      %321 = vperm.xlu0 %320, %v295
      %v322 = vpop.permute.xlu0 %321
      %v326 = vunpack.c.l.b16 %v296
      %v327 = vunpack.c.l.b16 %v297
      %v328 = vpack.c.b16 %v327, %v326
      %vm329 = vcmask 523264
      %v331 = vsel %vm329, %v328, 0
      %333 = vmatprep.subr.bf16.mxu0 %v299
      %334 = vmatpush1.bf16.msra.mxu0 %v298
      %335 = vmatprep.subr.bf16.mxu0 %v303
      %336 = vmatpush1.bf16.msra.mxu0 %v302
      %337 = vmatprep.subr.bf16.mxu0 %v307
      %338 = vmatpush1.bf16.msra.mxu0 %v306
      %339 = vmatprep.subr.bf16.mxu0 %v311
      %340 = vmatpush1.bf16.msra.mxu0 %v310
      %341 = vmatprep.subr.bf16.mxu0 0
      %342 = vmatpush1.bf16.msra.mxu0 0
      %343 = vmatprep.subr.bf16.mxu0 0
      %344 = vmatpush1.bf16.msra.mxu0 0
      %345 = vmatprep.subr.bf16.mxu0 0
      %346 = vmatpush1.bf16.msra.mxu0 0
      %347 = vmatprep.subr.bf16.mxu0 0
      %348 = vmatpush1.bf16.msra.mxu0 0
      %349 = vmatprep.subr.bf16.mxu0 0
      %350 = vmatpush1.bf16.msra.mxu0 0
      %351 = vmatprep.subr.bf16.mxu0 0
      %352 = vmatpush1.bf16.msra.mxu0 0
      %353 = vmatprep.subr.bf16.mxu0 0
      %354 = vmatpush1.bf16.msra.mxu0 0
      %355 = vmatprep.subr.bf16.mxu0 0
      %356 = vmatpush1.bf16.msra.mxu0 0
      %357 = vmatprep.subr.bf16.mxu0 0
      %358 = vmatpush1.bf16.msra.mxu0 0
      %359 = vmatprep.subr.bf16.mxu0 0
      %360 = vmatpush1.bf16.msra.mxu0 0
      %361 = vmatprep.subr.bf16.mxu0 0
      %362 = vmatpush1.bf16.msra.mxu0 0
      %363 = vmatprep.subr.bf16.mxu0 0
      %364 = vmatpush1.bf16.msra.mxu0 0
      %365 = vmatprep.mubr.bf16.mxu0 0
      %366 = vmatmul.mubr.bf16.gmra.mrb[0].mxu0 %v331
      %v367 = vpop.f32.mrb[0].mxu0
      %v368 = vadd.f32 %v317, %v367
      %v369 = vpop.f32.mrb[0].mxu0
      %v370 = vadd.f32 %v317, %v369
      %v371 = vpop.f32.mrb[0].mxu0
      %v372 = vadd.f32 %v322, %v371
      %v373 = vpop.f32.mrb[0].mxu0
      %v374 = vadd.f32 %v322, %v373
      %375 = vdwg.mxu0
      %376 = vmatprep.subr.bf16.mxu0 %v301
      %377 = vmatpush1.bf16.msra.mxu0 %v300
      %378 = vmatprep.subr.bf16.mxu0 %v305
      %379 = vmatpush1.bf16.msra.mxu0 %v304
      %380 = vmatprep.subr.bf16.mxu0 %v309
      %381 = vmatpush1.bf16.msra.mxu0 %v308
      %382 = vmatprep.subr.bf16.mxu0 %v313
      %383 = vmatpush1.bf16.msra.mxu0 %v312
      %384 = vmatprep.subr.bf16.mxu0 0
      %385 = vmatpush1.bf16.msra.mxu0 0
      %386 = vmatprep.subr.bf16.mxu0 0
      %387 = vmatpush1.bf16.msra.mxu0 0
      %388 = vmatprep.subr.bf16.mxu0 0
      %389 = vmatpush1.bf16.msra.mxu0 0
      %390 = vmatprep.subr.bf16.mxu0 0
      %391 = vmatpush1.bf16.msra.mxu0 0
      %392 = vmatprep.subr.bf16.mxu0 0
      %393 = vmatpush1.bf16.msra.mxu0 0
      %394 = vmatprep.subr.bf16.mxu0 0
      %395 = vmatpush1.bf16.msra.mxu0 0
      %396 = vmatprep.subr.bf16.mxu0 0
      %397 = vmatpush1.bf16.msra.mxu0 0
      %398 = vmatprep.subr.bf16.mxu0 0
      %399 = vmatpush1.bf16.msra.mxu0 0
      %400 = vmatprep.subr.bf16.mxu0 0
      %401 = vmatpush1.bf16.msra.mxu0 0
      %402 = vmatprep.subr.bf16.mxu0 0
      %403 = vmatpush1.bf16.msra.mxu0 0
      %404 = vmatprep.subr.bf16.mxu0 0
      %405 = vmatpush1.bf16.msra.mxu0 0
      %406 = vmatprep.subr.bf16.mxu0 0
      %407 = vmatpush1.bf16.msra.mxu0 0
      %408 = vmatprep.mubr.bf16.mxu0 0
      %409 = vmatmul.mubr.bf16.gmra.mrb[0].mxu0 %v331
      %v410 = vpop.f32.mrb[0].mxu0
      %v411 = vadd.f32 %v317, %v410
      %v412 = vpop.f32.mrb[0].mxu0
      %v413 = vadd.f32 %v317, %v412
      %v414 = vpop.f32.mrb[0].mxu0
      %v415 = vadd.f32 %v322, %v414
      %v416 = vpop.f32.mrb[0].mxu0
      %v417 = vadd.f32 %v322, %v416
      %418 = vdwg.mxu0
      %v419 = vmax.f32 %v368, 0.0
      %v420 = vmax.f32 %v370, 0.0
      %v421 = vmax.f32 %v411, 0.0
      %v422 = vmax.f32 %v413, 0.0
      %v423 = vmax.f32 %v372, 0.0
      %v424 = vmax.f32 %v374, 0.0
      %v425 = vmax.f32 %v415, 0.0
      %v426 = vmax.f32 %v417, 0.0
      %v427 = vld [vmem:[%s1] ss:$4 sm:$0xf]
      %s428 = scalar_lea.vmem %s1, 1
      %v429 = vld [vmem:[%s428] ss:$4 sm:$0xf]
      %s430 = scalar_lea.vmem %s1, 2
      %v431 = vld [vmem:[%s430] ss:$4 sm:$0xf]
      %s432 = scalar_lea.vmem %s1, 3
      %v433 = vld [vmem:[%s432] ss:$4 sm:$0xf]
      %v435 = vlaneseq
      %v436 = vshrl.u32 %v435, 7
      %v437 = vsub.s32 0, %v436
      %v438 = vrot.slane %v427, %v437
      %v439 = vlaneseq
      %v440 = vshrl.u32 %v439, 7
      %v441 = vsub.s32 1, %v440
      %v442 = vrot.slane %v427, %v441
      %v443 = vlaneseq
      %v444 = vshrl.u32 %v443, 7
      %v445 = vsub.s32 2, %v444
      %v446 = vrot.slane %v427, %v445
      %v447 = vlaneseq
      %v448 = vshrl.u32 %v447, 7
      %v449 = vsub.s32 3, %v448
      %v450 = vrot.slane %v427, %v449
      %v455 = vmul.f32 %v419, %v438
      %v456 = vmul.f32 %v420, %v442
      %v457 = vmul.f32 %v421, %v446
      %v458 = vmul.f32 %v422, %v450
      %v459 = vmul.f32 %v423, %v438
      %v460 = vmul.f32 %v424, %v442
      %v461 = vmul.f32 %v425, %v446
      %v462 = vmul.f32 %v426, %v450
      %v464 = vlaneseq
      %v465 = vshrl.u32 %v464, 7
      %v466 = vsub.s32 0, %v465
      %v467 = vrot.slane %v429, %v466
      %v468 = vlaneseq
      %v469 = vshrl.u32 %v468, 7
      %v470 = vsub.s32 1, %v469
      %v471 = vrot.slane %v429, %v470
      %v472 = vlaneseq
      %v473 = vshrl.u32 %v472, 7
      %v474 = vsub.s32 2, %v473
      %v475 = vrot.slane %v429, %v474
      %v476 = vlaneseq
      %v477 = vshrl.u32 %v476, 7
      %v478 = vsub.s32 3, %v477
      %v479 = vrot.slane %v429, %v478
      %v484 = vmul.f32 %v419, %v467
      %v485 = vmul.f32 %v420, %v471
      %v486 = vmul.f32 %v421, %v475
      %v487 = vmul.f32 %v422, %v479
      %v488 = vmul.f32 %v423, %v467
      %v489 = vmul.f32 %v424, %v471
      %v490 = vmul.f32 %v425, %v475
      %v491 = vmul.f32 %v426, %v479
      %492 = vrot.lane.b32.xlu0 %v455, 17
      %v493 = vpop.permute.xlu0 %492
      %494 = vrot.lane.b32.xlu0 %v459, 17
      %v495 = vpop.permute.xlu0 %494
      %496 = vrot.lane.b32.xlu0 %v456, 17
      %v497 = vpop.permute.xlu0 %496
      %498 = vrot.lane.b32.xlu0 %v460, 17
      %v499 = vpop.permute.xlu0 %498
      %500 = vrot.lane.b32.xlu0 %v457, 17
      %v501 = vpop.permute.xlu0 %500
      %502 = vrot.lane.b32.xlu0 %v461, 17
      %v503 = vpop.permute.xlu0 %502
      %504 = vrot.lane.b32.xlu0 %v458, 17
      %v505 = vpop.permute.xlu0 %504
      %506 = vrot.lane.b32.xlu0 %v462, 17
      %v507 = vpop.permute.xlu0 %506
      %v508 = vlaneseq
      %v509 = vand.u32 %v508, 127
      %vm510 = vcmp.lt.s32.totalorder %v509, 17
      %v511 = vsel %vm510, %v501, %v505
      %v512 = vsel %vm510, %v503, %v507
      %v513 = vsel %vm510, %v497, %v501
      %v514 = vsel %vm510, %v499, %v503
      %v515 = vsel %vm510, %v493, %v497
      %v516 = vsel %vm510, %v495, %v499
      %v517 = vsel %vm510, %v505, %v493
      %v518 = vsel %vm510, %v507, %v495
      %v520 = vlaneseq
      %v521 = vshrl.u32 %v520, 7
      %v522 = vsub.s32 0, %v521
      %v523 = vrot.slane %v431, %v522
      %v524 = vlaneseq
      %v525 = vshrl.u32 %v524, 7
      %v526 = vsub.s32 1, %v525
      %v527 = vrot.slane %v431, %v526
      %v528 = vlaneseq
      %v529 = vshrl.u32 %v528, 7
      %v530 = vsub.s32 2, %v529
      %v531 = vrot.slane %v431, %v530
      %v532 = vlaneseq
      %v533 = vshrl.u32 %v532, 7
      %v534 = vsub.s32 3, %v533
      %v535 = vrot.slane %v431, %v534
      %v540 = vmul.f32 %v517, %v523
      %v541 = vmul.f32 %v515, %v527
      %v542 = vmul.f32 %v513, %v531
      %v543 = vmul.f32 %v511, %v535
      %v544 = vmul.f32 %v518, %v523
      %v545 = vmul.f32 %v516, %v527
      %v546 = vmul.f32 %v514, %v531
      %v547 = vmul.f32 %v512, %v535
      %v548 = vpack.c.bf16 %v544, %v540
      %v549 = vpack.c.bf16 %v545, %v541
      %v550 = vpack.c.bf16 %v546, %v542
      %v551 = vpack.c.bf16 %v547, %v543
      %552 = vst [vmem:[#allocation2] sm:$0xff] %v548
      %553 = vst [vmem:[#allocation2 + $0x8] sm:$0xff] %v549
      %554 = vst [vmem:[#allocation2 + $0x10] sm:$0xff] %v550
      %555 = vst [vmem:[#allocation2 + $0x18] sm:$0xff] %v551
      %556 = vrot.lane.b32.xlu0 %v419, 16
      %v557 = vpop.permute.xlu0 %556
      %558 = vrot.lane.b32.xlu0 %v423, 16
      %v559 = vpop.permute.xlu0 %558
      %560 = vrot.lane.b32.xlu0 %v420, 16
      %v561 = vpop.permute.xlu0 %560
      %562 = vrot.lane.b32.xlu0 %v424, 16
      %v563 = vpop.permute.xlu0 %562
      %564 = vrot.lane.b32.xlu0 %v421, 16
      %v565 = vpop.permute.xlu0 %564
      %566 = vrot.lane.b32.xlu0 %v425, 16
      %v567 = vpop.permute.xlu0 %566
      %568 = vrot.lane.b32.xlu0 %v422, 16
      %v569 = vpop.permute.xlu0 %568
      %570 = vrot.lane.b32.xlu0 %v426, 16
      %v571 = vpop.permute.xlu0 %570
      %vm572 = vcmp.lt.s32.totalorder %v509, 16
      %v573 = vsel %vm572, %v565, %v569
      %v574 = vsel %vm572, %v567, %v571
      %v575 = vsel %vm572, %v561, %v565
      %v576 = vsel %vm572, %v563, %v567
      %v577 = vsel %vm572, %v557, %v561
      %v578 = vsel %vm572, %v559, %v563
      %v579 = vsel %vm572, %v569, %v557
      %v580 = vsel %vm572, %v571, %v559
      %v581 = vmul.f32 %v579, %v523
      %v582 = vmul.f32 %v577, %v527
      %v583 = vmul.f32 %v575, %v531
      %v584 = vmul.f32 %v573, %v535
      %v585 = vmul.f32 %v580, %v523
      %v586 = vmul.f32 %v578, %v527
      %v587 = vmul.f32 %v576, %v531
      %v588 = vmul.f32 %v574, %v535
      %v589 = vpack.c.bf16 %v585, %v581
      %v590 = vpack.c.bf16 %v586, %v582
      %v591 = vpack.c.bf16 %v587, %v583
      %v592 = vpack.c.bf16 %v588, %v584
      %593 = vst [vmem:[#allocation2 + $0x20] sm:$0xff] %v589
      %594 = vst [vmem:[#allocation2 + $0x28] sm:$0xff] %v590
      %595 = vst [vmem:[#allocation2 + $0x30] sm:$0xff] %v591
      %596 = vst [vmem:[#allocation2 + $0x38] sm:$0xff] %v592
      %597 = vrot.lane.b32.xlu0 %v484, 15
      %v598 = vpop.permute.xlu0 %597
      %599 = vrot.lane.b32.xlu0 %v488, 15
      %v600 = vpop.permute.xlu0 %599
      %601 = vrot.lane.b32.xlu0 %v485, 15
      %v602 = vpop.permute.xlu0 %601
      %603 = vrot.lane.b32.xlu0 %v489, 15
      %v604 = vpop.permute.xlu0 %603
      %605 = vrot.lane.b32.xlu0 %v486, 15
      %v606 = vpop.permute.xlu0 %605
      %607 = vrot.lane.b32.xlu0 %v490, 15
      %v608 = vpop.permute.xlu0 %607
      %609 = vrot.lane.b32.xlu0 %v487, 15
      %v610 = vpop.permute.xlu0 %609
      %611 = vrot.lane.b32.xlu0 %v491, 15
      %v612 = vpop.permute.xlu0 %611
      %vm613 = vcmp.lt.s32.totalorder %v509, 15
      %v614 = vsel %vm613, %v606, %v610
      %v615 = vsel %vm613, %v608, %v612
      %v616 = vsel %vm613, %v602, %v606
      %v617 = vsel %vm613, %v604, %v608
      %v618 = vsel %vm613, %v598, %v602
      %v619 = vsel %vm613, %v600, %v604
      %v620 = vsel %vm613, %v610, %v598
      %v621 = vsel %vm613, %v612, %v600
      %v622 = vmul.f32 %v620, %v523
      %v623 = vmul.f32 %v618, %v527
      %v624 = vmul.f32 %v616, %v531
      %v625 = vmul.f32 %v614, %v535
      %v626 = vmul.f32 %v621, %v523
      %v627 = vmul.f32 %v619, %v527
      %v628 = vmul.f32 %v617, %v531
      %v629 = vmul.f32 %v615, %v535
      %v630 = vpack.c.bf16 %v626, %v622
      %v631 = vpack.c.bf16 %v627, %v623
      %v632 = vpack.c.bf16 %v628, %v624
      %v633 = vpack.c.bf16 %v629, %v625
      %634 = vst [vmem:[#allocation2 + $0x40] sm:$0xff] %v630
      %635 = vst [vmem:[#allocation2 + $0x48] sm:$0xff] %v631
      %636 = vst [vmem:[#allocation2 + $0x50] sm:$0xff] %v632
      %637 = vst [vmem:[#allocation2 + $0x58] sm:$0xff] %v633
      %638 = vrot.lane.b32.xlu0 %v455, 1
      %v639 = vpop.permute.xlu0 %638
      %640 = vrot.lane.b32.xlu0 %v459, 1
      %v641 = vpop.permute.xlu0 %640
      %642 = vrot.lane.b32.xlu0 %v456, 1
      %v643 = vpop.permute.xlu0 %642
      %644 = vrot.lane.b32.xlu0 %v460, 1
      %v645 = vpop.permute.xlu0 %644
      %646 = vrot.lane.b32.xlu0 %v457, 1
      %v647 = vpop.permute.xlu0 %646
      %648 = vrot.lane.b32.xlu0 %v461, 1
      %v649 = vpop.permute.xlu0 %648
      %650 = vrot.lane.b32.xlu0 %v458, 1
      %v651 = vpop.permute.xlu0 %650
      %652 = vrot.lane.b32.xlu0 %v462, 1
      %v653 = vpop.permute.xlu0 %652
      %vm654 = vcmp.lt.s32.totalorder %v509, 1
      %v655 = vsel %vm654, %v647, %v651
      %v656 = vsel %vm654, %v649, %v653
      %v657 = vsel %vm654, %v643, %v647
      %v658 = vsel %vm654, %v645, %v649
      %v659 = vsel %vm654, %v639, %v643
      %v660 = vsel %vm654, %v641, %v645
      %v661 = vsel %vm654, %v651, %v639
      %v662 = vsel %vm654, %v653, %v641
      %v663 = vpack.c.bf16 %v662, %v661
      %v664 = vpack.c.bf16 %v660, %v659
      %v665 = vpack.c.bf16 %v658, %v657
      %v666 = vpack.c.bf16 %v656, %v655
      %667 = vst [vmem:[#allocation2 + $0x60] sm:$0xff] %v663
      %668 = vst [vmem:[#allocation2 + $0x68] sm:$0xff] %v664
      %669 = vst [vmem:[#allocation2 + $0x70] sm:$0xff] %v665
      %670 = vst [vmem:[#allocation2 + $0x78] sm:$0xff] %v666
      %v671 = vpack.c.bf16 %v423, %v419
      %v672 = vpack.c.bf16 %v424, %v420
      %v673 = vpack.c.bf16 %v425, %v421
      %v674 = vpack.c.bf16 %v426, %v422
      %675 = vst [vmem:[#allocation2 + $0x80] sm:$0xff] %v671
      %676 = vst [vmem:[#allocation2 + $0x88] sm:$0xff] %v672
      %677 = vst [vmem:[#allocation2 + $0x90] sm:$0xff] %v673
      %678 = vst [vmem:[#allocation2 + $0x98] sm:$0xff] %v674
      %679 = vrot.lane.b32.xlu0 %v484, 127
      %v680 = vpop.permute.xlu0 %679
      %681 = vrot.lane.b32.xlu0 %v488, 127
      %v682 = vpop.permute.xlu0 %681
      %683 = vrot.lane.b32.xlu0 %v485, 127
      %v684 = vpop.permute.xlu0 %683
      %685 = vrot.lane.b32.xlu0 %v489, 127
      %v686 = vpop.permute.xlu0 %685
      %687 = vrot.lane.b32.xlu0 %v486, 127
      %v688 = vpop.permute.xlu0 %687
      %689 = vrot.lane.b32.xlu0 %v490, 127
      %v690 = vpop.permute.xlu0 %689
      %691 = vrot.lane.b32.xlu0 %v487, 127
      %v692 = vpop.permute.xlu0 %691
      %693 = vrot.lane.b32.xlu0 %v491, 127
      %v694 = vpop.permute.xlu0 %693
      %vm695 = vcmp.lt.s32.totalorder %v509, 127
      %v696 = vsel %vm695, %v688, %v692
      %v697 = vsel %vm695, %v690, %v694
      %v698 = vsel %vm695, %v684, %v688
      %v699 = vsel %vm695, %v686, %v690
      %v700 = vsel %vm695, %v680, %v684
      %v701 = vsel %vm695, %v682, %v686
      %v702 = vsel %vm695, %v692, %v680
      %v703 = vsel %vm695, %v694, %v682
      %v704 = vpack.c.bf16 %v701, %v700
      %v705 = vpack.c.bf16 %v699, %v698
      %v706 = vpack.c.bf16 %v697, %v696
      %v707 = vpack.c.bf16 %v703, %v702
      %708 = vst [vmem:[#allocation2 + $0xa0] sm:$0xff] %v704
      %709 = vst [vmem:[#allocation2 + $0xa8] sm:$0xff] %v705
      %710 = vst [vmem:[#allocation2 + $0xb0] sm:$0xff] %v706
      %711 = vst [vmem:[#allocation2 + $0xb8] sm:$0xff] %v707
      %712 = vrot.lane.b32.xlu0 %v455, 113
      %v713 = vpop.permute.xlu0 %712
      %714 = vrot.lane.b32.xlu0 %v459, 113
      %v715 = vpop.permute.xlu0 %714
      %716 = vrot.lane.b32.xlu0 %v456, 113
      %v717 = vpop.permute.xlu0 %716
      %718 = vrot.lane.b32.xlu0 %v460, 113
      %v719 = vpop.permute.xlu0 %718
      %720 = vrot.lane.b32.xlu0 %v457, 113
      %v721 = vpop.permute.xlu0 %720
      %722 = vrot.lane.b32.xlu0 %v461, 113
      %v723 = vpop.permute.xlu0 %722
      %724 = vrot.lane.b32.xlu0 %v458, 113
      %v725 = vpop.permute.xlu0 %724
      %726 = vrot.lane.b32.xlu0 %v462, 113
      %v727 = vpop.permute.xlu0 %726
      %vm728 = vcmp.lt.s32.totalorder %v509, 113
      %v729 = vsel %vm728, %v721, %v725
      %v730 = vsel %vm728, %v723, %v727
      %v731 = vsel %vm728, %v717, %v721
      %v732 = vsel %vm728, %v719, %v723
      %v733 = vsel %vm728, %v713, %v717
      %v734 = vsel %vm728, %v715, %v719
      %v735 = vsel %vm728, %v725, %v713
      %v736 = vsel %vm728, %v727, %v715
      %v738 = vlaneseq
      %v739 = vshrl.u32 %v738, 7
      %v740 = vsub.s32 0, %v739
      %v741 = vrot.slane %v433, %v740
      %v742 = vlaneseq
      %v743 = vshrl.u32 %v742, 7
      %v744 = vsub.s32 1, %v743
      %v745 = vrot.slane %v433, %v744
      %v746 = vlaneseq
      %v747 = vshrl.u32 %v746, 7
      %v748 = vsub.s32 2, %v747
      %v749 = vrot.slane %v433, %v748
      %v750 = vlaneseq
      %v751 = vshrl.u32 %v750, 7
      %v752 = vsub.s32 3, %v751
      %v753 = vrot.slane %v433, %v752
      %v758 = vmul.f32 %v733, %v741
      %v759 = vmul.f32 %v731, %v745
      %v760 = vmul.f32 %v729, %v749
      %v761 = vmul.f32 %v735, %v753
      %v762 = vmul.f32 %v734, %v741
      %v763 = vmul.f32 %v732, %v745
      %v764 = vmul.f32 %v730, %v749
      %v765 = vmul.f32 %v736, %v753
      %v766 = vpack.c.bf16 %v762, %v758
      %v767 = vpack.c.bf16 %v763, %v759
      %v768 = vpack.c.bf16 %v764, %v760
      %v769 = vpack.c.bf16 %v765, %v761
      %770 = vst [vmem:[#allocation2 + $0xc0] sm:$0xff] %v766
      %771 = vst [vmem:[#allocation2 + $0xc8] sm:$0xff] %v767
      %772 = vst [vmem:[#allocation2 + $0xd0] sm:$0xff] %v768
      %773 = vst [vmem:[#allocation2 + $0xd8] sm:$0xff] %v769
      %774 = vrot.lane.b32.xlu0 %v419, 112
      %v775 = vpop.permute.xlu0 %774
      %776 = vrot.lane.b32.xlu0 %v423, 112
      %v777 = vpop.permute.xlu0 %776
      %778 = vrot.lane.b32.xlu0 %v420, 112
      %v779 = vpop.permute.xlu0 %778
      %780 = vrot.lane.b32.xlu0 %v424, 112
      %v781 = vpop.permute.xlu0 %780
      %782 = vrot.lane.b32.xlu0 %v421, 112
      %v783 = vpop.permute.xlu0 %782
      %784 = vrot.lane.b32.xlu0 %v425, 112
      %v785 = vpop.permute.xlu0 %784
      %786 = vrot.lane.b32.xlu0 %v422, 112
      %v787 = vpop.permute.xlu0 %786
      %788 = vrot.lane.b32.xlu0 %v426, 112
      %v789 = vpop.permute.xlu0 %788
      %vm790 = vcmp.lt.s32.totalorder %v509, 112
      %v791 = vsel %vm790, %v783, %v787
      %v792 = vsel %vm790, %v785, %v789
      %v793 = vsel %vm790, %v779, %v783
      %v794 = vsel %vm790, %v781, %v785
      %v795 = vsel %vm790, %v775, %v779
      %v796 = vsel %vm790, %v777, %v781
      %v797 = vsel %vm790, %v787, %v775
      %v798 = vsel %vm790, %v789, %v777
      %v799 = vmul.f32 %v795, %v741
      %v800 = vmul.f32 %v793, %v745
      %v801 = vmul.f32 %v791, %v749
      %v802 = vmul.f32 %v797, %v753
      %v803 = vmul.f32 %v796, %v741
      %v804 = vmul.f32 %v794, %v745
      %v805 = vmul.f32 %v792, %v749
      %v806 = vmul.f32 %v798, %v753
      %v807 = vpack.c.bf16 %v803, %v799
      %v808 = vpack.c.bf16 %v804, %v800
      %v809 = vpack.c.bf16 %v805, %v801
      %v810 = vpack.c.bf16 %v806, %v802
      %811 = vst [vmem:[#allocation2 + $0xe0] sm:$0xff] %v807
      %812 = vst [vmem:[#allocation2 + $0xe8] sm:$0xff] %v808
      %813 = vst [vmem:[#allocation2 + $0xf0] sm:$0xff] %v809
      %814 = vst [vmem:[#allocation2 + $0xf8] sm:$0xff] %v810
      %815 = vrot.lane.b32.xlu0 %v484, 111
      %v816 = vpop.permute.xlu0 %815
      %817 = vrot.lane.b32.xlu0 %v488, 111
      %v818 = vpop.permute.xlu0 %817
      %819 = vrot.lane.b32.xlu0 %v485, 111
      %v820 = vpop.permute.xlu0 %819
      %821 = vrot.lane.b32.xlu0 %v489, 111
      %v822 = vpop.permute.xlu0 %821
      %823 = vrot.lane.b32.xlu0 %v486, 111
      %v824 = vpop.permute.xlu0 %823
      %825 = vrot.lane.b32.xlu0 %v490, 111
      %v826 = vpop.permute.xlu0 %825
      %827 = vrot.lane.b32.xlu0 %v487, 111
      %v828 = vpop.permute.xlu0 %827
      %829 = vrot.lane.b32.xlu0 %v491, 111
      %v830 = vpop.permute.xlu0 %829
      %vm831 = vcmp.lt.s32.totalorder %v509, 111
      %v832 = vsel %vm831, %v824, %v828
      %v833 = vsel %vm831, %v826, %v830
      %v834 = vsel %vm831, %v820, %v824
      %v835 = vsel %vm831, %v822, %v826
      %v836 = vsel %vm831, %v816, %v820
      %v837 = vsel %vm831, %v818, %v822
      %v838 = vsel %vm831, %v828, %v816
      %v839 = vsel %vm831, %v830, %v818
      %v840 = vmul.f32 %v836, %v741
      %v841 = vmul.f32 %v834, %v745
      %v842 = vmul.f32 %v832, %v749
      %v843 = vmul.f32 %v838, %v753
      %v844 = vmul.f32 %v837, %v741
      %v845 = vmul.f32 %v835, %v745
      %v846 = vmul.f32 %v833, %v749
      %v847 = vmul.f32 %v839, %v753
      %v848 = vpack.c.bf16 %v844, %v840
      %v849 = vpack.c.bf16 %v845, %v841
      %v850 = vpack.c.bf16 %v846, %v842
      %v851 = vpack.c.bf16 %v847, %v843
      %852 = vst [vmem:[#allocation2 + $0x100] sm:$0xff] %v848
      %853 = vst [vmem:[#allocation2 + $0x108] sm:$0xff] %v849
      %854 = vst [vmem:[#allocation2 + $0x110] sm:$0xff] %v850
      %855 = vst [vmem:[#allocation2 + $0x118] sm:$0xff] %v851
      %v856 = vld [vmem:[%s2 + $0x10] sm:$0xff]
      %v857 = vld [vmem:[%s2 + $0x18] sm:$0xff]
      %v858 = vld [vmem:[%s4] sm:$0xff]
      %v859 = vld [vmem:[%s4 + $0x8] sm:$0xff]
      %v860 = vld [vmem:[#allocation2] sm:$0xff]
      %v861 = vld [vmem:[#allocation2 + $0x8] sm:$0xff]
      %v862 = vld [vmem:[#allocation2 + $0x10] sm:$0xff]
      %v863 = vld [vmem:[#allocation2 + $0x18] sm:$0xff]
      %v864 = vld [vmem:[#allocation2 + $0x20] sm:$0xff]
      %v865 = vld [vmem:[#allocation2 + $0x28] sm:$0xff]
      %v866 = vld [vmem:[#allocation2 + $0x30] sm:$0xff]
      %v867 = vld [vmem:[#allocation2 + $0x38] sm:$0xff]
      %v868 = vld [vmem:[#allocation2 + $0x40] sm:$0xff]
      %v869 = vld [vmem:[#allocation2 + $0x48] sm:$0xff]
      %v870 = vld [vmem:[#allocation2 + $0x50] sm:$0xff]
      %v871 = vld [vmem:[#allocation2 + $0x58] sm:$0xff]
      %v872 = vld [vmem:[#allocation2 + $0x60] sm:$0xff]
      %v873 = vld [vmem:[#allocation2 + $0x68] sm:$0xff]
      %v874 = vld [vmem:[#allocation2 + $0x70] sm:$0xff]
      %v875 = vld [vmem:[#allocation2 + $0x78] sm:$0xff]
      %v876 = vld [vmem:[#allocation2 + $0x80] sm:$0xff]
      %v877 = vld [vmem:[#allocation2 + $0x88] sm:$0xff]
      %v878 = vld [vmem:[#allocation2 + $0x90] sm:$0xff]
      %v879 = vld [vmem:[#allocation2 + $0x98] sm:$0xff]
      %v880 = vld [vmem:[#allocation2 + $0xa0] sm:$0xff]
      %v881 = vld [vmem:[#allocation2 + $0xa8] sm:$0xff]
      %v882 = vld [vmem:[#allocation2 + $0xb0] sm:$0xff]
      %v883 = vld [vmem:[#allocation2 + $0xb8] sm:$0xff]
      %v884 = vld [vmem:[#allocation2 + $0xc0] sm:$0xff]
      %v885 = vld [vmem:[#allocation2 + $0xc8] sm:$0xff]
      %v886 = vld [vmem:[#allocation2 + $0xd0] sm:$0xff]
      %v887 = vld [vmem:[#allocation2 + $0xd8] sm:$0xff]
      %v888 = vld [vmem:[#allocation2 + $0xe0] sm:$0xff]
      %v889 = vld [vmem:[#allocation2 + $0xe8] sm:$0xff]
      %v890 = vld [vmem:[#allocation2 + $0xf0] sm:$0xff]
      %v891 = vld [vmem:[#allocation2 + $0xf8] sm:$0xff]
      %v892 = vld [vmem:[#allocation2 + $0x100] sm:$0xff]
      %v893 = vld [vmem:[#allocation2 + $0x108] sm:$0xff]
      %v894 = vld [vmem:[#allocation2 + $0x110] sm:$0xff]
      %v895 = vld [vmem:[#allocation2 + $0x118] sm:$0xff]
      %897 = vset.pattern.permute.xlu0 0
      %898 = vperm.xlu0 %897, %v856
      %v899 = vpop.permute.xlu0 %898
      %902 = vset.pattern.permute.xlu0 0
      %903 = vperm.xlu0 %902, %v857
      %v904 = vpop.permute.xlu0 %903
      %v908 = vunpack.c.l.b16 %v858
      %v909 = vunpack.c.h.b16 %v858
      %v910 = vunpack.c.l.b16 %v859
      %v911 = vunpack.c.h.b16 %v859
      %v912 = vpack.c.b16 %v910, %v908
      %v913 = vpack.c.b16 %v911, %v909
      %vm915 = vcmask 130048
      %v917 = vsel %vm915, %v913, 0
      %919 = vmatprep.subr.bf16.mxu0 %v861
      %920 = vmatpush1.bf16.msra.mxu0 %v860
      %921 = vmatprep.subr.bf16.mxu0 %v865
      %922 = vmatpush1.bf16.msra.mxu0 %v864
      %923 = vmatprep.subr.bf16.mxu0 %v869
      %924 = vmatpush1.bf16.msra.mxu0 %v868
      %925 = vmatprep.subr.bf16.mxu0 %v873
      %926 = vmatpush1.bf16.msra.mxu0 %v872
      %927 = vmatprep.subr.bf16.mxu0 %v877
      %928 = vmatpush1.bf16.msra.mxu0 %v876
      %929 = vmatprep.subr.bf16.mxu0 %v881
      %930 = vmatpush1.bf16.msra.mxu0 %v880
      %931 = vmatprep.subr.bf16.mxu0 %v885
      %932 = vmatpush1.bf16.msra.mxu0 %v884
      %933 = vmatprep.subr.bf16.mxu0 %v889
      %934 = vmatpush1.bf16.msra.mxu0 %v888
      %935 = vmatprep.subr.bf16.mxu0 %v893
      %936 = vmatpush1.bf16.msra.mxu0 %v892
      %937 = vmatprep.subr.bf16.mxu0 0
      %938 = vmatpush1.bf16.msra.mxu0 0
      %939 = vmatprep.subr.bf16.mxu0 0
      %940 = vmatpush1.bf16.msra.mxu0 0
      %941 = vmatprep.subr.bf16.mxu0 0
      %942 = vmatpush1.bf16.msra.mxu0 0
      %943 = vmatprep.subr.bf16.mxu0 0
      %944 = vmatpush1.bf16.msra.mxu0 0
      %945 = vmatprep.subr.bf16.mxu0 0
      %946 = vmatpush1.bf16.msra.mxu0 0
      %947 = vmatprep.subr.bf16.mxu0 0
      %948 = vmatpush1.bf16.msra.mxu0 0
      %949 = vmatprep.subr.bf16.mxu0 0
      %950 = vmatpush1.bf16.msra.mxu0 0
      %951 = vmatprep.mubr.bf16.mxu0 %v917
      %952 = vmatmul.mubr.bf16.gmra.mrb[0].mxu0 %v912
      %v953 = vpop.f32.mrb[0].mxu0
      %v954 = vadd.f32 %v899, %v953
      %v955 = vpop.f32.mrb[0].mxu0
      %v956 = vadd.f32 %v899, %v955
      %v957 = vpop.f32.mrb[0].mxu0
      %v958 = vadd.f32 %v904, %v957
      %v959 = vpop.f32.mrb[0].mxu0
      %v960 = vadd.f32 %v904, %v959
      %961 = vdwg.mxu0
      %962 = vmatprep.subr.bf16.mxu0 %v863
      %963 = vmatpush1.bf16.msra.mxu0 %v862
      %964 = vmatprep.subr.bf16.mxu0 %v867
      %965 = vmatpush1.bf16.msra.mxu0 %v866
      %966 = vmatprep.subr.bf16.mxu0 %v871
      %967 = vmatpush1.bf16.msra.mxu0 %v870
      %968 = vmatprep.subr.bf16.mxu0 %v875
      %969 = vmatpush1.bf16.msra.mxu0 %v874
      %970 = vmatprep.subr.bf16.mxu0 %v879
      %971 = vmatpush1.bf16.msra.mxu0 %v878
      %972 = vmatprep.subr.bf16.mxu0 %v883
      %973 = vmatpush1.bf16.msra.mxu0 %v882
      %974 = vmatprep.subr.bf16.mxu0 %v887
      %975 = vmatpush1.bf16.msra.mxu0 %v886
      %976 = vmatprep.subr.bf16.mxu0 %v891
      %977 = vmatpush1.bf16.msra.mxu0 %v890
      %978 = vmatprep.subr.bf16.mxu0 %v895
      %979 = vmatpush1.bf16.msra.mxu0 %v894
      %980 = vmatprep.subr.bf16.mxu0 0
      %981 = vmatpush1.bf16.msra.mxu0 0
      %982 = vmatprep.subr.bf16.mxu0 0
      %983 = vmatpush1.bf16.msra.mxu0 0
      %984 = vmatprep.subr.bf16.mxu0 0
      %985 = vmatpush1.bf16.msra.mxu0 0
      %986 = vmatprep.subr.bf16.mxu0 0
      %987 = vmatpush1.bf16.msra.mxu0 0
      %988 = vmatprep.subr.bf16.mxu0 0
      %989 = vmatpush1.bf16.msra.mxu0 0
      %990 = vmatprep.subr.bf16.mxu0 0
      %991 = vmatpush1.bf16.msra.mxu0 0
      %992 = vmatprep.subr.bf16.mxu0 0
      %993 = vmatpush1.bf16.msra.mxu0 0
      %994 = vmatprep.mubr.bf16.mxu0 %v917
      %995 = vmatmul.mubr.bf16.gmra.mrb[0].mxu0 %v912
      %v996 = vpop.f32.mrb[0].mxu0
      %v997 = vadd.f32 %v899, %v996
      %v998 = vpop.f32.mrb[0].mxu0
      %v999 = vadd.f32 %v899, %v998
      %v1000 = vpop.f32.mrb[0].mxu0
      %v1001 = vadd.f32 %v904, %v1000
      %v1002 = vpop.f32.mrb[0].mxu0
      %v1003 = vadd.f32 %v904, %v1002
      %1004 = vdwg.mxu0
      %v1005 = vmax.f32 %v954, 0.0
      %v1006 = vmax.f32 %v956, 0.0
      %v1007 = vmax.f32 %v997, 0.0
      %v1008 = vmax.f32 %v999, 0.0
      %v1009 = vmax.f32 %v958, 0.0
      %v1010 = vmax.f32 %v960, 0.0
      %v1011 = vmax.f32 %v1001, 0.0
      %v1012 = vmax.f32 %v1003, 0.0
      %v1013 = vld [vmem:[%s2 + $0x20] sm:$0xff]
      %v1014 = vld [vmem:[%s2 + $0x28] sm:$0xff]
      %v1015 = vld [vmem:[%s2 + $0x30] sm:$0xff]
      %v1016 = vld [vmem:[%s2 + $0x38] sm:$0xff]
      %v1017 = vld [vmem:[%s2 + $0x40] sm:$0xff]
      %v1018 = vld [vmem:[%s2 + $0x48] sm:$0xff]
      %v1019 = vld [vmem:[%s2 + $0x50] sm:$0xff]
      %v1020 = vld [vmem:[%s2 + $0x58] sm:$0xff]
      %v1021 = vld [vmem:[%s5] sm:$0xf]
      %v1022 = vld [vmem:[%s5 + $0x4] sm:$0xf]
      %v1023 = vld [vmem:[%s5 + $0x8] sm:$0xf]
      %v1024 = vld [vmem:[%s5 + $0xc] sm:$0xf]
      %v1025 = vld [vmem:[%s5 + $0x10] sm:$0xf]
      %v1026 = vld [vmem:[%s5 + $0x14] sm:$0xf]
      %v1027 = vld [vmem:[%s5 + $0x18] sm:$0xf]
      %v1028 = vld [vmem:[%s5 + $0x1c] sm:$0xf]
      %v1029 = vpack.c.bf16 %v1009, %v1005
      %v1030 = vpack.c.bf16 %v1010, %v1006
      %v1031 = vpack.c.bf16 %v1011, %v1007
      %v1032 = vpack.c.bf16 %v1012, %v1008
      %1034 = vset.pattern.permute.xlu0 0
      %1035 = vperm.xlu0 %1034, %v1013
      %v1036 = vpop.permute.xlu0 %1035
      %1039 = vset.pattern.permute.xlu0 0
      %1040 = vperm.xlu0 %1039, %v1014
      %v1041 = vpop.permute.xlu0 %1040
      %1044 = vset.pattern.permute.xlu0 0
      %1045 = vperm.xlu0 %1044, %v1015
      %v1046 = vpop.permute.xlu0 %1045
      %1049 = vset.pattern.permute.xlu0 0
      %1050 = vperm.xlu0 %1049, %v1016
      %v1051 = vpop.permute.xlu0 %1050
      %1054 = vset.pattern.permute.xlu0 0
      %1055 = vperm.xlu0 %1054, %v1017
      %v1056 = vpop.permute.xlu0 %1055
      %1059 = vset.pattern.permute.xlu0 0
      %1060 = vperm.xlu0 %1059, %v1018
      %v1061 = vpop.permute.xlu0 %1060
      %1064 = vset.pattern.permute.xlu0 0
      %1065 = vperm.xlu0 %1064, %v1019
      %v1066 = vpop.permute.xlu0 %1065
      %1069 = vset.pattern.permute.xlu0 0
      %1070 = vperm.xlu0 %1069, %v1020
      %v1071 = vpop.permute.xlu0 %1070
      %v1081 = vunpack.c.l.b16 %v1021
      %v1082 = vunpack.c.l.b16 %v1022
      %v1083 = vunpack.c.l.b16 %v1023
      %v1084 = vunpack.c.l.b16 %v1024
      %v1085 = vunpack.c.l.b16 %v1025
      %v1086 = vunpack.c.l.b16 %v1026
      %v1087 = vunpack.c.l.b16 %v1027
      %v1088 = vunpack.c.l.b16 %v1028
      %v1089 = vpack.c.b16 %v1082, %v1081
      %v1090 = vpack.c.b16 %v1084, %v1083
      %v1091 = vpack.c.b16 %v1086, %v1085
      %v1092 = vpack.c.b16 %v1088, %v1087
      %v1094 = vsel %vm915, %v1089, 0
      %v1097 = vsel %vm915, %v1090, 0
      %v1100 = vsel %vm915, %v1091, 0
      %v1103 = vsel %vm915, %v1092, 0
      %1105 = vmatprep.subr.bf16.mxu0 %v1030
      %1106 = vmatpush1.bf16.msra.mxu0 %v1029
      %1107 = vmatprep.subr.bf16.mxu0 0
      %1108 = vmatpush1.bf16.msra.mxu0 0
      %1109 = vmatprep.subr.bf16.mxu0 0
      %1110 = vmatpush1.bf16.msra.mxu0 0
      %1111 = vmatprep.subr.bf16.mxu0 0
      %1112 = vmatpush1.bf16.msra.mxu0 0
      %1113 = vmatprep.subr.bf16.mxu0 0
      %1114 = vmatpush1.bf16.msra.mxu0 0
      %1115 = vmatprep.subr.bf16.mxu0 0
      %1116 = vmatpush1.bf16.msra.mxu0 0
      %1117 = vmatprep.subr.bf16.mxu0 0
      %1118 = vmatpush1.bf16.msra.mxu0 0
      %1119 = vmatprep.subr.bf16.mxu0 0
      %1120 = vmatpush1.bf16.msra.mxu0 0
      %1121 = vmatprep.subr.bf16.mxu0 0
      %1122 = vmatpush1.bf16.msra.mxu0 0
      %1123 = vmatprep.subr.bf16.mxu0 0
      %1124 = vmatpush1.bf16.msra.mxu0 0
      %1125 = vmatprep.subr.bf16.mxu0 0
      %1126 = vmatpush1.bf16.msra.mxu0 0
      %1127 = vmatprep.subr.bf16.mxu0 0
      %1128 = vmatpush1.bf16.msra.mxu0 0
      %1129 = vmatprep.subr.bf16.mxu0 0
      %1130 = vmatpush1.bf16.msra.mxu0 0
      %1131 = vmatprep.subr.bf16.mxu0 0
      %1132 = vmatpush1.bf16.msra.mxu0 0
      %1133 = vmatprep.subr.bf16.mxu0 0
      %1134 = vmatpush1.bf16.msra.mxu0 0
      %1135 = vmatprep.subr.bf16.mxu0 0
      %1136 = vmatpush1.bf16.msra.mxu0 0
      %1137 = vmatprep.mubr.bf16.mxu0 0
      %1138 = vmatmul.mubr.bf16.gmra.mrb[0].mxu0 %v1094
      %v1139 = vpop.f32.mrb[0].mxu0
      %v1140 = vadd.f32 %v1036, %v1139
      %v1141 = vpop.f32.mrb[0].mxu0
      %v1142 = vadd.f32 %v1036, %v1141
      %v1143 = vpop.f32.mrb[0].mxu0
      %v1144 = vadd.f32 %v1041, %v1143
      %v1145 = vpop.f32.mrb[0].mxu0
      %v1146 = vadd.f32 %v1041, %v1145
      %1147 = vmatprep.mubr.bf16.mxu0 0
      %1148 = vmatmul.mubr.bf16.gmra.mrb[0].mxu0 %v1097
      %v1149 = vpop.f32.mrb[0].mxu0
      %v1150 = vadd.f32 %v1046, %v1149
      %v1151 = vpop.f32.mrb[0].mxu0
      %v1152 = vadd.f32 %v1046, %v1151
      %v1153 = vpop.f32.mrb[0].mxu0
      %v1154 = vadd.f32 %v1051, %v1153
      %v1155 = vpop.f32.mrb[0].mxu0
      %v1156 = vadd.f32 %v1051, %v1155
      %1157 = vmatprep.mubr.bf16.mxu0 0
      %1158 = vmatmul.mubr.bf16.gmra.mrb[0].mxu0 %v1100
      %v1159 = vpop.f32.mrb[0].mxu0
      %v1160 = vadd.f32 %v1056, %v1159
      %v1161 = vpop.f32.mrb[0].mxu0
      %v1162 = vadd.f32 %v1056, %v1161
      %v1163 = vpop.f32.mrb[0].mxu0
      %v1164 = vadd.f32 %v1061, %v1163
      %v1165 = vpop.f32.mrb[0].mxu0
      %v1166 = vadd.f32 %v1061, %v1165
      %1167 = vmatprep.mubr.bf16.mxu0 0
      %1168 = vmatmul.mubr.bf16.gmra.mrb[0].mxu0 %v1103
      %v1169 = vpop.f32.mrb[0].mxu0
      %v1170 = vadd.f32 %v1066, %v1169
      %v1171 = vpop.f32.mrb[0].mxu0
      %v1172 = vadd.f32 %v1066, %v1171
      %v1173 = vpop.f32.mrb[0].mxu0
      %v1174 = vadd.f32 %v1071, %v1173
      %v1175 = vpop.f32.mrb[0].mxu0
      %v1176 = vadd.f32 %v1071, %v1175
      %1177 = vdwg.mxu0
      %1178 = vmatprep.subr.bf16.mxu0 %v1032
      %1179 = vmatpush1.bf16.msra.mxu0 %v1031
      %1180 = vmatprep.subr.bf16.mxu0 0
      %1181 = vmatpush1.bf16.msra.mxu0 0
      %1182 = vmatprep.subr.bf16.mxu0 0
      %1183 = vmatpush1.bf16.msra.mxu0 0
      %1184 = vmatprep.subr.bf16.mxu0 0
      %1185 = vmatpush1.bf16.msra.mxu0 0
      %1186 = vmatprep.subr.bf16.mxu0 0
      %1187 = vmatpush1.bf16.msra.mxu0 0
      %1188 = vmatprep.subr.bf16.mxu0 0
      %1189 = vmatpush1.bf16.msra.mxu0 0
      %1190 = vmatprep.subr.bf16.mxu0 0
      %1191 = vmatpush1.bf16.msra.mxu0 0
      %1192 = vmatprep.subr.bf16.mxu0 0
      %1193 = vmatpush1.bf16.msra.mxu0 0
      %1194 = vmatprep.subr.bf16.mxu0 0
      %1195 = vmatpush1.bf16.msra.mxu0 0
      %1196 = vmatprep.subr.bf16.mxu0 0
      %1197 = vmatpush1.bf16.msra.mxu0 0
      %1198 = vmatprep.subr.bf16.mxu0 0
      %1199 = vmatpush1.bf16.msra.mxu0 0
      %1200 = vmatprep.subr.bf16.mxu0 0
      %1201 = vmatpush1.bf16.msra.mxu0 0
      %1202 = vmatprep.subr.bf16.mxu0 0
      %1203 = vmatpush1.bf16.msra.mxu0 0
      %1204 = vmatprep.subr.bf16.mxu0 0
      %1205 = vmatpush1.bf16.msra.mxu0 0
      %1206 = vmatprep.subr.bf16.mxu0 0
      %1207 = vmatpush1.bf16.msra.mxu0 0
      %1208 = vmatprep.subr.bf16.mxu0 0
      %1209 = vmatpush1.bf16.msra.mxu0 0
      %1210 = vmatprep.mubr.bf16.mxu0 0
      %1211 = vmatmul.mubr.bf16.gmra.mrb[0].mxu0 %v1094
      %v1212 = vpop.f32.mrb[0].mxu0
      %v1213 = vadd.f32 %v1036, %v1212
      %v1214 = vpop.f32.mrb[0].mxu0
      %v1215 = vadd.f32 %v1036, %v1214
      %v1216 = vpop.f32.mrb[0].mxu0
      %v1217 = vadd.f32 %v1041, %v1216
      %v1218 = vpop.f32.mrb[0].mxu0
      %v1219 = vadd.f32 %v1041, %v1218
      %1220 = vmatprep.mubr.bf16.mxu0 0
      %1221 = vmatmul.mubr.bf16.gmra.mrb[0].mxu0 %v1097
      %v1222 = vpop.f32.mrb[0].mxu0
      %v1223 = vadd.f32 %v1046, %v1222
      %v1224 = vpop.f32.mrb[0].mxu0
      %v1225 = vadd.f32 %v1046, %v1224
      %v1226 = vpop.f32.mrb[0].mxu0
      %v1227 = vadd.f32 %v1051, %v1226
      %v1228 = vpop.f32.mrb[0].mxu0
      %v1229 = vadd.f32 %v1051, %v1228
      %1230 = vmatprep.mubr.bf16.mxu0 0
      %1231 = vmatmul.mubr.bf16.gmra.mrb[0].mxu0 %v1100
      %v1232 = vpop.f32.mrb[0].mxu0
      %v1233 = vadd.f32 %v1056, %v1232
      %v1234 = vpop.f32.mrb[0].mxu0
      %v1235 = vadd.f32 %v1056, %v1234
      %v1236 = vpop.f32.mrb[0].mxu0
      %v1237 = vadd.f32 %v1061, %v1236
      %v1238 = vpop.f32.mrb[0].mxu0
      %v1239 = vadd.f32 %v1061, %v1238
      %1240 = vmatprep.mubr.bf16.mxu0 0
      %1241 = vmatmul.mubr.bf16.gmra.mrb[0].mxu0 %v1103
      %v1242 = vpop.f32.mrb[0].mxu0
      %v1243 = vadd.f32 %v1066, %v1242
      %v1244 = vpop.f32.mrb[0].mxu0
      %v1245 = vadd.f32 %v1066, %v1244
      %v1246 = vpop.f32.mrb[0].mxu0
      %v1247 = vadd.f32 %v1071, %v1246
      %v1248 = vpop.f32.mrb[0].mxu0
      %v1249 = vadd.f32 %v1071, %v1248
      %1250 = vdwg.mxu0
      %v1251 = vld [vmem:[%s251] sm:$0xff]
      %v1252 = vld [vmem:[%s251 + $0x8] sm:$0xff]
      %v1253 = vld [vmem:[%s251 + $0x10] sm:$0xff]
      %v1254 = vld [vmem:[%s251 + $0x18] sm:$0xff]
      %v1255 = vld [vmem:[%s251 + $0x20] sm:$0xff]
      %v1256 = vld [vmem:[%s251 + $0x28] sm:$0xff]
      %v1257 = vld [vmem:[%s251 + $0x30] sm:$0xff]
      %v1258 = vld [vmem:[%s251 + $0x38] sm:$0xff]
      %v1259 = vld [vmem:[%s251 + $0x40] sm:$0xff]
      %v1260 = vld [vmem:[%s251 + $0x48] sm:$0xff]
      %v1261 = vld [vmem:[%s251 + $0x50] sm:$0xff]
      %v1262 = vld [vmem:[%s251 + $0x58] sm:$0xff]
      %v1263 = vld [vmem:[%s251 + $0x60] sm:$0xff]
      %v1264 = vld [vmem:[%s251 + $0x68] sm:$0xff]
      %v1265 = vld [vmem:[%s251 + $0x70] sm:$0xff]
      %v1266 = vld [vmem:[%s251 + $0x78] sm:$0xff]
      %v1267 = vadd.f32 %v1140, %v1251
      %v1268 = vadd.f32 %v1142, %v1252
      %v1269 = vadd.f32 %v1144, %v1253
      %v1270 = vadd.f32 %v1146, %v1254
      %v1271 = vadd.f32 %v1150, %v1255
      %v1272 = vadd.f32 %v1152, %v1256
      %v1273 = vadd.f32 %v1154, %v1257
      %v1274 = vadd.f32 %v1156, %v1258
      %v1275 = vadd.f32 %v1160, %v1259
      %v1276 = vadd.f32 %v1162, %v1260
      %v1277 = vadd.f32 %v1164, %v1261
      %v1278 = vadd.f32 %v1166, %v1262
      %v1279 = vadd.f32 %v1170, %v1263
      %v1280 = vadd.f32 %v1172, %v1264
      %v1281 = vadd.f32 %v1174, %v1265
      %v1282 = vadd.f32 %v1176, %v1266
      %v1283 = vmax.f32 %v1267, 0.0
      %v1284 = vmax.f32 %v1268, 0.0
      %v1285 = vmax.f32 %v1269, 0.0
      %v1286 = vmax.f32 %v1270, 0.0
      %v1287 = vmax.f32 %v1271, 0.0
      %v1288 = vmax.f32 %v1272, 0.0
      %v1289 = vmax.f32 %v1273, 0.0
      %v1290 = vmax.f32 %v1274, 0.0
      %v1291 = vmax.f32 %v1275, 0.0
      %v1292 = vmax.f32 %v1276, 0.0
      %v1293 = vmax.f32 %v1277, 0.0
      %v1294 = vmax.f32 %v1278, 0.0
      %v1295 = vmax.f32 %v1279, 0.0
      %v1296 = vmax.f32 %v1280, 0.0
      %v1297 = vmax.f32 %v1281, 0.0
      %v1298 = vmax.f32 %v1282, 0.0
      %1299 = vst [vmem:[%s258] sm:$0xff] %v1283
      %1300 = vst [vmem:[%s258 + $0x8] sm:$0xff] %v1284
      %1301 = vst [vmem:[%s258 + $0x10] sm:$0xff] %v1285
      %1302 = vst [vmem:[%s258 + $0x18] sm:$0xff] %v1286
      %1303 = vst [vmem:[%s258 + $0x20] sm:$0xff] %v1287
      %1304 = vst [vmem:[%s258 + $0x28] sm:$0xff] %v1288
      %1305 = vst [vmem:[%s258 + $0x30] sm:$0xff] %v1289
      %1306 = vst [vmem:[%s258 + $0x38] sm:$0xff] %v1290
      %1307 = vst [vmem:[%s258 + $0x40] sm:$0xff] %v1291
      %1308 = vst [vmem:[%s258 + $0x48] sm:$0xff] %v1292
      %1309 = vst [vmem:[%s258 + $0x50] sm:$0xff] %v1293
      %1310 = vst [vmem:[%s258 + $0x58] sm:$0xff] %v1294
      %1311 = vst [vmem:[%s258 + $0x60] sm:$0xff] %v1295
      %1312 = vst [vmem:[%s258 + $0x68] sm:$0xff] %v1296
      %1313 = vst [vmem:[%s258 + $0x70] sm:$0xff] %v1297
      %1314 = vst [vmem:[%s258 + $0x78] sm:$0xff] %v1298
      %v1315 = vld [vmem:[%s277] sm:$0xff]
      %v1316 = vld [vmem:[%s277 + $0x8] sm:$0xff]
      %v1317 = vld [vmem:[%s277 + $0x10] sm:$0xff]
      %v1318 = vld [vmem:[%s277 + $0x18] sm:$0xff]
      %v1319 = vld [vmem:[%s277 + $0x20] sm:$0xff]
      %v1320 = vld [vmem:[%s277 + $0x28] sm:$0xff]
      %v1321 = vld [vmem:[%s277 + $0x30] sm:$0xff]
      %v1322 = vld [vmem:[%s277 + $0x38] sm:$0xff]
      %v1323 = vld [vmem:[%s277 + $0x40] sm:$0xff]
      %v1324 = vld [vmem:[%s277 + $0x48] sm:$0xff]
      %v1325 = vld [vmem:[%s277 + $0x50] sm:$0xff]
      %v1326 = vld [vmem:[%s277 + $0x58] sm:$0xff]
      %v1327 = vld [vmem:[%s277 + $0x60] sm:$0xff]
      %v1328 = vld [vmem:[%s277 + $0x68] sm:$0xff]
      %v1329 = vld [vmem:[%s277 + $0x70] sm:$0xff]
      %v1330 = vld [vmem:[%s277 + $0x78] sm:$0xff]
      %v1331 = vadd.f32 %v1213, %v1315
      %v1332 = vadd.f32 %v1215, %v1316
      %v1333 = vadd.f32 %v1217, %v1317
      %v1334 = vadd.f32 %v1219, %v1318
      %v1335 = vadd.f32 %v1223, %v1319
      %v1336 = vadd.f32 %v1225, %v1320
      %v1337 = vadd.f32 %v1227, %v1321
      %v1338 = vadd.f32 %v1229, %v1322
      %v1339 = vadd.f32 %v1233, %v1323
      %v1340 = vadd.f32 %v1235, %v1324
      %v1341 = vadd.f32 %v1237, %v1325
      %v1342 = vadd.f32 %v1239, %v1326
      %v1343 = vadd.f32 %v1243, %v1327
      %v1344 = vadd.f32 %v1245, %v1328
      %v1345 = vadd.f32 %v1247, %v1329
      %v1346 = vadd.f32 %v1249, %v1330
      %v1347 = vmax.f32 %v1331, 0.0
      %v1348 = vmax.f32 %v1332, 0.0
      %v1349 = vmax.f32 %v1333, 0.0
      %v1350 = vmax.f32 %v1334, 0.0
      %v1351 = vmax.f32 %v1335, 0.0
      %v1352 = vmax.f32 %v1336, 0.0
      %v1353 = vmax.f32 %v1337, 0.0
      %v1354 = vmax.f32 %v1338, 0.0
      %v1355 = vmax.f32 %v1339, 0.0
      %v1356 = vmax.f32 %v1340, 0.0
      %v1357 = vmax.f32 %v1341, 0.0
      %v1358 = vmax.f32 %v1342, 0.0
      %v1359 = vmax.f32 %v1343, 0.0
      %v1360 = vmax.f32 %v1344, 0.0
      %v1361 = vmax.f32 %v1345, 0.0
      %v1362 = vmax.f32 %v1346, 0.0
      %s1363 = scalar_lea.vmem %s258, 128
      %1364 = vst [vmem:[%s1363] sm:$0xff] %v1347
      %1365 = vst [vmem:[%s1363 + $0x8] sm:$0xff] %v1348
      %1366 = vst [vmem:[%s1363 + $0x10] sm:$0xff] %v1349
      %1367 = vst [vmem:[%s1363 + $0x18] sm:$0xff] %v1350
      %1368 = vst [vmem:[%s1363 + $0x20] sm:$0xff] %v1351
      %1369 = vst [vmem:[%s1363 + $0x28] sm:$0xff] %v1352
      %1370 = vst [vmem:[%s1363 + $0x30] sm:$0xff] %v1353
      %1371 = vst [vmem:[%s1363 + $0x38] sm:$0xff] %v1354
      %1372 = vst [vmem:[%s1363 + $0x40] sm:$0xff] %v1355
      %1373 = vst [vmem:[%s1363 + $0x48] sm:$0xff] %v1356
      %1374 = vst [vmem:[%s1363 + $0x50] sm:$0xff] %v1357
      %1375 = vst [vmem:[%s1363 + $0x58] sm:$0xff] %v1358
      %1376 = vst [vmem:[%s1363 + $0x60] sm:$0xff] %v1359
      %1377 = vst [vmem:[%s1363 + $0x68] sm:$0xff] %v1360
      %1378 = vst [vmem:[%s1363 + $0x70] sm:$0xff] %v1361
      %1379 = vst [vmem:[%s1363 + $0x78] sm:$0xff] %v1362
      %s1380 = smul.u32 2, %s17
      %p1381 = scmp.lt.s32.totalorder %s1380, 3
      %s1382 = scalar_select %p1381, %s1380, 3
      %s1383 = smul.addr %s1382, 16
      %s1384 = smul.addr %s1383, 8
      %s1385 = scalar_lea.vmem %s6, %s1384
      // Predicated region
      $region45: #{bottleneck_pallas.1} parent=43 // pred_check
        %p1386 = pneg %p166
      $region46: #{bottleneck_pallas.1} parent=43 // pred_check_branch
        %1388 = sbr.rel (%p1386) target = $region48
      $region47: #{bottleneck_pallas.1} parent=43 // pred_region
        %s1389 = smul.u32 2, %s17
      $region48: #{bottleneck_pallas.1} parent=43 // pred_fallthru
        _
    $region44: #{bottleneck_pallas.1} parent=5 // pred_fallthru
      _
    %p1390 = scmp.le.s32.totalorder 2, %s12
    // Predicated region
    $region49: #{bottleneck_pallas.1} parent=5 // pred_check
      %p1391 = pneg %p1390
    $region50: #{bottleneck_pallas.1} parent=5 // pred_check_branch
      %1393 = sbr.rel (%p1391) target = $region52
    $region51: #{bottleneck_pallas.1} parent=5 // pred_region
      %s1394 = ssub.s32 %s12, 2
      // Predicated region
      $region53: #{bottleneck_pallas.1} parent=51 // pred_check
        %p1395 = pneg %p172
      $region54: #{bottleneck_pallas.1} parent=51 // pred_check_branch
        %1397 = sbr.rel (%p1395) target = $region56
      $region55: #{bottleneck_pallas.1} parent=51 // pred_region
        %s1398 = smul.u32 2, %s18
        %p1399 = scmp.lt.s32.totalorder %s1398, 3
        %s1400 = scalar_select %p1399, %s1398, 3
        %s1401 = smul.addr %s1400, 16
        %s1402 = smul.addr %s1401, 8
        %s1403 = scalar_lea.vmem %s6, %s1402
      $region56: #{bottleneck_pallas.1} parent=51 // pred_fallthru
        _
    $region52: #{bottleneck_pallas.1} parent=5 // pred_fallthru
      _
  $region6: #{bottleneck_pallas.1} parent=0 // loop_footer
    %s16 = sadd.s32 1, %s12
  $region7: #{bottleneck_pallas.1} parent=0 // loop_footer_branch
    %11 = sbr.rel target = $region3
  $region8: #{bottleneck_pallas.1} parent=0 // loop_exit
    _

</llo_original>
